<compile_context>
chip_gen: v7x
topology: tpu7x:2x2x1
jax: 0.10.0
libtpu: 0.0.40
codegen_flags: <defaults>
</compile_context>

<pallas_src>
import jax
import jax.numpy as jnp
from jax.experimental import pallas as pl
from jax.experimental.pallas import tpu as pltpu

NUM_INPUTS = 73                       # warehouse observation size
HIDDEN = 64                           # hidden_size (fnn output and gru hidden)
FNN1 = 512
FNN2 = 256
DSET = (0,) + tuple(range(49, 73))    # 25 recurrent-branch features
HEAD_OUT = 128                        # packed head: [actor(64) | critic(1) | 0-pad]
XW_OUT = FNN1 + 3 * HIDDEN            # fused x-side RHS width: 512 + 192 = 704

MAX_TILE = 512                        # rows per grid step (review: 512 ~ 85% roofline)
MIN_ALIGN = 16                        # bf16 packed-sublane friendly row alignment


# ----------------------------------- kernel ----------------------------------
def _iam_kernel(x_ref, hxs_ref, masks_ref,
                wx_ref, bx_ref,                 # fused x-side [w1 | wih_rzn], merged bias
                whh_ref, bhn_ref,               # f32 hidden-side GRU weights, n-gate bias
                w2_ref, b2_ref, w3_ref, b3_ref,
                wh_rec_ref, wh_fnn_ref, bhead_ref,
                head_ref, hxs_out_ref):
    H = HIDDEN
    x_bf = x_ref[...].astype(jnp.bfloat16)            # (T, 73)
    h0 = hxs_ref[...] * masks_ref[...]                 # (T, H) f32

    # ---- single x-side MXU pass: MLP layer 1 + all three GRU input gates ----
    xw = jnp.dot(x_bf, wx_ref[...],
                 preferred_element_type=jnp.float32) + bx_ref[...]   # (T, 704)
    h1 = jnp.maximum(xw[:, :FNN1], 0.0)                               # (T, 512)
    gi_r = xw[:, FNN1:FNN1 + H]                  # bih_r + bhh_r already folded in
    gi_z = xw[:, FNN1 + H:FNN1 + 2 * H]          # bih_z + bhh_z already folded in
    gi_n = xw[:, FNN1 + 2 * H:]                  # bih_n only

    # ---- hidden-side GRU gates: one fused f32 matmul (recurrent fidelity) ----
    hw = jnp.dot(h0, whh_ref[...], preferred_element_type=jnp.float32)  # (T, 192)
    gh_r = hw[:, :H]
    gh_z = hw[:, H:2 * H]
    gh_n = hw[:, 2 * H:] + bhn_ref[...]

    r = jax.nn.sigmoid(gi_r + gh_r)
    z = jax.nn.sigmoid(gi_z + gh_z)
    n = jnp.tanh(gi_n + r * gh_n)
    h_new = (1.0 - z) * n + z * h0                                    # (T, H) f32

    # ---- rest of the fnn MLP: 512 -> 256 -> 64 with ReLU ---------------------
    h2 = jnp.maximum(
        jnp.dot(h1.astype(jnp.bfloat16), w2_ref[...],
                preferred_element_type=jnp.float32) + b2_ref[...], 0.0)
    fnn = jnp.maximum(
        jnp.dot(h2.astype(jnp.bfloat16), w3_ref[...],
                preferred_element_type=jnp.float32) + b3_ref[...], 0.0)

    # ---- packed actor/critic head, K split 64/64 (no concat) -----------------
    head = (jnp.dot(h_new.astype(jnp.bfloat16), wh_rec_ref[...],
                    preferred_element_type=jnp.float32)
            + jnp.dot(fnn.astype(jnp.bfloat16), wh_fnn_ref[...],
                      preferred_element_type=jnp.float32)
            + bhead_ref[...])                                         # (T, 128)

    head_ref[...] = head
    hxs_out_ref[...] = h_new


# ----------------------------------- wrapper ----------------------------------
def _round_up(v, m):
    return (v + m - 1) // m * m


def _choose_tiling(n):
    """Tile tracks N (padding <= 15 rows); >=2 parallel steps when N >= 32 so
    both v7x TensorCores get work. Single tile for tiny RL batches."""
    n_tiles = -(-n // MAX_TILE)
    if n >= 2 * MIN_ALIGN:
        n_tiles = max(n_tiles, 2)
    tile = _round_up(-(-n // n_tiles), MIN_ALIGN)
    return tile, n_tiles * tile, n_tiles


def warehouse_forward(kparams, x, rnn_hxs, masks):
    """Fused Pallas call. Batch-tiled grid; weights stay VMEM resident."""
    N = x.shape[0]
    tile, pN, n_tiles = _choose_tiling(N)
    if pN != N:
        pad = ((0, pN - N), (0, 0))
        x = jnp.pad(x, pad)
        rnn_hxs = jnp.pad(rnn_hxs, pad)
        masks = jnp.pad(masks, pad)

    weights = (
        kparams["wx"], kparams["bx"],
        kparams["whh"], kparams["bhn"],
        kparams["w2"], kparams["b2"], kparams["w3"], kparams["b3"],
        kparams["wh_rec"], kparams["wh_fnn"], kparams["bhead"],
    )

    def act_spec(feat):
        return pl.BlockSpec((tile, feat), lambda i: (i, 0))

    def w_spec(w):
        return pl.BlockSpec(w.shape, lambda i: (0, 0))   # resident across grid

    flops = 2 * pN * (NUM_INPUTS * XW_OUT + HIDDEN * 3 * HIDDEN
                      + FNN1 * FNN2 + FNN2 * HIDDEN + 2 * HIDDEN * HEAD_OUT)
    transcendentals = 3 * HIDDEN * pN                    # 2x sigmoid + 1x tanh per row/gate
    bytes_accessed = (pN * (NUM_INPUTS + HIDDEN + 1 + HEAD_OUT + HIDDEN) * 4
                      + sum(int(w.size) * w.dtype.itemsize for w in weights))

    head, hxs_out = pl.pallas_call(
        _iam_kernel,
        grid=(n_tiles,),
        out_shape=(
            jax.ShapeDtypeStruct((pN, HEAD_OUT), jnp.float32),   # [actor|critic|pad]
            jax.ShapeDtypeStruct((pN, HIDDEN), jnp.float32),     # new rnn_hxs
        ),
        in_specs=[act_spec(NUM_INPUTS), act_spec(HIDDEN), act_spec(1)]
                 + [w_spec(w) for w in weights],
        out_specs=(act_spec(HEAD_OUT), act_spec(HIDDEN)),
        compiler_params=pltpu.CompilerParams(
            dimension_semantics=("parallel",)),
        cost_estimate=pl.CostEstimate(flops=flops,
                                      transcendentals=transcendentals,
                                      bytes_accessed=bytes_accessed),
    )(x, rnn_hxs, masks, *weights)

    actor = head[:N, :HIDDEN]
    critic = head[:N, HIDDEN:HIDDEN + 1]
    return critic, actor, hxs_out[:N]


# ------------------------------- parameter init --------------------------------
def init_raw_params(key):
    """PyTorch-equivalent params: orthogonal(gain=sqrt(2)) + zero bias for
    Linear, orthogonal(gain=1) + zero bias for the GRU.  Stored as (in, out)."""
    ortho = jax.nn.initializers.orthogonal
    ks = jax.random.split(key, 7)
    g = 2.0 ** 0.5
    H = HIDDEN
    return {
        # fnn
        "w1": ortho(g)(ks[0], (NUM_INPUTS, FNN1), jnp.float32),
        "b1": jnp.zeros((1, FNN1), jnp.float32),
        "w2": ortho(g)(ks[1], (FNN1, FNN2), jnp.float32),
        "b2": jnp.zeros((1, FNN2), jnp.float32),
        "w3": ortho(g)(ks[2], (FNN2, H), jnp.float32),
        "b3": jnp.zeros((1, H), jnp.float32),
        # GRU over the 25 dset features; PyTorch gate layout [r | z | n]
        "wih": ortho(1.0)(ks[3], (25, 3 * H), jnp.float32),
        "whh": ortho(1.0)(ks[4], (H, 3 * H), jnp.float32),
        "bih": jnp.zeros((1, 3 * H), jnp.float32),
        "bhh": jnp.zeros((1, 3 * H), jnp.float32),
        # actor / critic heads on concat(h_new, fnn_out)
        "wa": ortho(g)(ks[5], (2 * H, H), jnp.float32),
        "ba": jnp.zeros((1, H), jnp.float32),
        "wc": ortho(g)(ks[6], (2 * H, 1), jnp.float32),
        "bc": jnp.zeros((1, 1), jnp.float32),
    }


def pack_params(p):
    """Repack raw params into the kernel layout: dset fold, x-side weight
    fusion [w1 | wih_rzn], merged per-gate biases, packed lane-dense head,
    bf16 matmul weights (GRU hidden-side and all biases stay f32)."""
    H = HIDDEN
    dset = jnp.asarray(DSET, jnp.int32)

    # (25, 3H) -> (73, 3H), zero except dset rows (folds the gather into x @ wih)
    wih_full = jnp.zeros((NUM_INPUTS, 3 * H), p["wih"].dtype).at[dset].set(p["wih"])

    # fused x-side RHS: [w1 | wih_r | wih_z | wih_n] -> (73, 704)
    wx = jnp.concatenate([p["w1"], wih_full], axis=1)
    # fused x-side bias: [b1 | bih_r+bhh_r | bih_z+bhh_z | bih_n]
    bih, bhh = p["bih"], p["bhh"]
    bx = jnp.concatenate([p["b1"],
                          bih[:, :H] + bhh[:, :H],
                          bih[:, H:2 * H] + bhh[:, H:2 * H],
                          bih[:, 2 * H:]], axis=1)                    # (1, 704)

    # packed head: columns [0:H) = actor, column H = critic, rest zero
    whead = jnp.zeros((2 * H, HEAD_OUT), jnp.float32)
    whead = whead.at[:, :H].set(p["wa"]).at[:, H:H + 1].set(p["wc"])
    bhead = jnp.zeros((1, HEAD_OUT), jnp.float32)
    bhead = bhead.at[:, :H].set(p["ba"]).at[:, H:H + 1].set(p["bc"])

    return {
        "wx": wx.astype(jnp.bfloat16),
        "bx": bx,
        "whh": p["whh"],                    # (64, 192) f32: recurrent fidelity
        "bhn": p["bhh"][:, 2 * H:],         # (1, 64) f32, added inside r * gh_n
        "w2": p["w2"].astype(jnp.bfloat16), "b2": p["b2"],
        "w3": p["w3"].astype(jnp.bfloat16), "b3": p["b3"],
        "wh_rec": whead[:H].astype(jnp.bfloat16),   # K-rows for h_new
        "wh_fnn": whead[H:].astype(jnp.bfloat16),   # K-rows for fnn_out
        "bhead": bhead,
    }


# ---------------------------- reference (plain JAX, f32) -----------------------
def reference_forward(p, x, hxs, masks):
    H = HIDDEN
    x_rec = x[:, jnp.asarray(DSET, jnp.int32)]
    h0 = hxs * masks
    gi = x_rec @ p["wih"] + p["bih"]
    gh = h0 @ p["whh"] + p["bhh"]
    r = jax.nn.sigmoid(gi[:, :H] + gh[:, :H])
    z = jax.nn.sigmoid(gi[:, H:2 * H] + gh[:, H:2 * H])
    n = jnp.tanh(gi[:, 2 * H:] + r * gh[:, 2 * H:])
    h_new = (1 - z) * n + z * h0
    h1 = jax.nn.relu(x @ p["w1"] + p["b1"])
    h2 = jax.nn.relu(h1 @ p["w2"] + p["b2"])
    fnn = jax.nn.relu(h2 @ p["w3"] + p["b3"])
    feat = jnp.concatenate([h_new, fnn], axis=1)
    return feat @ p["wc"] + p["bc"], feat @ p["wa"] + p["ba"], h_new


if __name__ == "__main__":
    key = jax.random.PRNGKey(0)
    kp_key, kx, kh, km = jax.random.split(key, 4)
    N = 8  # num_processes (small RL batch)

    raw = init_raw_params(kp_key)
    kparams = pack_params(raw)

    x = jax.random.normal(kx, (N, NUM_INPUTS), jnp.float32)
    rnn_hxs = jax.random.normal(kh, (N, HIDDEN), jnp.float32)
    masks = (jax.random.uniform(km, (N, 1)) > 0.2).astype(jnp.float32)

    critic, actor, hxs_out = warehouse_forward(kparams, x, rnn_hxs, masks)
    jax.block_until_ready((critic, actor, hxs_out))

    # sanity check against the f32 reference (MLP/head matmuls run in bf16)
    c_ref, a_ref, h_ref = reference_forward(raw, x, rnn_hxs, masks)
    assert critic.shape == (N, 1) and actor.shape == (N, HIDDEN)
    assert hxs_out.shape == (N, HIDDEN)
    assert jnp.allclose(critic, c_ref, atol=2e-2, rtol=2e-2)
    assert jnp.allclose(actor, a_ref, atol=2e-2, rtol=2e-2)
    assert jnp.allclose(hxs_out, h_ref, atol=2e-2, rtol=2e-2)

    print("KERNEL_OK")
</pallas_src>

<mosaic_0001>
module attributes {stable_mosaic.version = 11 : i64} {
  func.func @_iam_kernel(%arg0: i32, %arg1: memref<16x73xf32, #tpu.memory_space<vmem>>, %arg2: memref<16x64xf32, #tpu.memory_space<vmem>>, %arg3: memref<16x1xf32, #tpu.memory_space<vmem>>, %arg4: memref<73x704xbf16, #tpu.memory_space<vmem>>, %arg5: memref<1x704xf32, #tpu.memory_space<vmem>>, %arg6: memref<64x192xf32, #tpu.memory_space<vmem>>, %arg7: memref<1x64xf32, #tpu.memory_space<vmem>>, %arg8: memref<512x256xbf16, #tpu.memory_space<vmem>>, %arg9: memref<1x256xf32, #tpu.memory_space<vmem>>, %arg10: memref<256x64xbf16, #tpu.memory_space<vmem>>, %arg11: memref<1x64xf32, #tpu.memory_space<vmem>>, %arg12: memref<64x128xbf16, #tpu.memory_space<vmem>>, %arg13: memref<64x128xbf16, #tpu.memory_space<vmem>>, %arg14: memref<1x128xf32, #tpu.memory_space<vmem>>, %arg15: memref<16x128xf32, #tpu.memory_space<vmem>>, %arg16: memref<16x64xf32, #tpu.memory_space<vmem>>) attributes {dimension_semantics = [#tpu.dimension_semantics<parallel>], iteration_bounds = array<i64: 1>, scalar_prefetch = 0 : i64, scratch_operands = 0 : i64, tpu.core_type = #tpu.core_type<tc>, window_params = [{transform_indices = @transform_0, window_bounds = array<i64: 16, 73>}, {transform_indices = @transform_1, window_bounds = array<i64: 16, 64>}, {transform_indices = @transform_2, window_bounds = array<i64: 16, 1>}, {pipeline_mode = #tpu.pipeline_mode<synchronous>, transform_indices = @transform_3, window_bounds = array<i64: 73, 704>}, {pipeline_mode = #tpu.pipeline_mode<synchronous>, transform_indices = @transform_4, window_bounds = array<i64: 1, 704>}, {pipeline_mode = #tpu.pipeline_mode<synchronous>, transform_indices = @transform_5, window_bounds = array<i64: 64, 192>}, {pipeline_mode = #tpu.pipeline_mode<synchronous>, transform_indices = @transform_6, window_bounds = array<i64: 1, 64>}, {pipeline_mode = #tpu.pipeline_mode<synchronous>, transform_indices = @transform_7, window_bounds = array<i64: 512, 256>}, {pipeline_mode = #tpu.pipeline_mode<synchronous>, transform_indices = @transform_8, window_bounds = array<i64: 1, 256>}, {pipeline_mode = #tpu.pipeline_mode<synchronous>, transform_indices = @transform_9, window_bounds = array<i64: 256, 64>}, {pipeline_mode = #tpu.pipeline_mode<synchronous>, transform_indices = @transform_10, window_bounds = array<i64: 1, 64>}, {pipeline_mode = #tpu.pipeline_mode<synchronous>, transform_indices = @transform_11, window_bounds = array<i64: 64, 128>}, {pipeline_mode = #tpu.pipeline_mode<synchronous>, transform_indices = @transform_12, window_bounds = array<i64: 64, 128>}, {pipeline_mode = #tpu.pipeline_mode<synchronous>, transform_indices = @transform_13, window_bounds = array<i64: 1, 128>}, {transform_indices = @transform_14, window_bounds = array<i64: 16, 128>}, {transform_indices = @transform_15, window_bounds = array<i64: 16, 64>}]} {
    %c0 = arith.constant 0 : index
    %c0_0 = arith.constant 0 : index
    %0 = vector.load %arg1[%c0, %c0_0] : memref<16x73xf32, #tpu.memory_space<vmem>>, vector<16x73xf32>
    %1 = arith.truncf %0 : vector<16x73xf32> to vector<16x73xbf16>
    %c0_1 = arith.constant 0 : index
    %c0_2 = arith.constant 0 : index
    %2 = vector.load %arg2[%c0_1, %c0_2] : memref<16x64xf32, #tpu.memory_space<vmem>>, vector<16x64xf32>
    %c0_3 = arith.constant 0 : index
    %c0_4 = arith.constant 0 : index
    %3 = vector.load %arg3[%c0_3, %c0_4] : memref<16x1xf32, #tpu.memory_space<vmem>>, vector<16x1xf32>
    %4 = vector.broadcast %3 : vector<16x1xf32> to vector<16x64xf32>
    %5 = arith.mulf %2, %4 : vector<16x64xf32>
    %c0_5 = arith.constant 0 : index
    %c0_6 = arith.constant 0 : index
    %6 = vector.load %arg4[%c0_5, %c0_6] : memref<73x704xbf16, #tpu.memory_space<vmem>>, vector<73x704xbf16>
    %cst = arith.constant dense<0.000000e+00> : vector<16x704xf32>
    %7 = tpu.matmul %1, %6, %cst {dimension_numbers = #tpu.dot_dimension_numbers<[1], [0], [0], [1], [0, 0, 1, 1], [], []>} : vector<16x73xbf16>, vector<73x704xbf16>, vector<16x704xf32> -> vector<16x704xf32>
    %c0_7 = arith.constant 0 : index
    %c0_8 = arith.constant 0 : index
    %8 = vector.load %arg5[%c0_7, %c0_8] : memref<1x704xf32, #tpu.memory_space<vmem>>, vector<1x704xf32>
    %9 = vector.broadcast %8 : vector<1x704xf32> to vector<16x704xf32>
    %10 = arith.addf %7, %9 : vector<16x704xf32>
    %11 = vector.extract_strided_slice %10 {offsets = [0, 0], sizes = [16, 512], strides = [1, 1]} : vector<16x704xf32> to vector<16x512xf32>
    %cst_9 = arith.constant 0.000000e+00 : f32
    %12 = vector.broadcast %cst_9 : f32 to vector<16x512xf32>
    %13 = arith.maximumf %11, %12 : vector<16x512xf32>
    %14 = vector.extract_strided_slice %10 {offsets = [0, 512], sizes = [16, 64], strides = [1, 1]} : vector<16x704xf32> to vector<16x64xf32>
    %15 = vector.extract_strided_slice %10 {offsets = [0, 576], sizes = [16, 64], strides = [1, 1]} : vector<16x704xf32> to vector<16x64xf32>
    %16 = vector.extract_strided_slice %10 {offsets = [0, 640], sizes = [16, 64], strides = [1, 1]} : vector<16x704xf32> to vector<16x64xf32>
    %c0_10 = arith.constant 0 : index
    %c0_11 = arith.constant 0 : index
    %17 = vector.load %arg6[%c0_10, %c0_11] : memref<64x192xf32, #tpu.memory_space<vmem>>, vector<64x192xf32>
    %cst_12 = arith.constant dense<0.000000e+00> : vector<16x192xf32>
    %18 = tpu.matmul %5, %17, %cst_12 {dimension_numbers = #tpu.dot_dimension_numbers<[1], [0], [0], [1], [0, 0, 1, 1], [], []>} : vector<16x64xf32>, vector<64x192xf32>, vector<16x192xf32> -> vector<16x192xf32>
    %19 = vector.extract_strided_slice %18 {offsets = [0, 0], sizes = [16, 64], strides = [1, 1]} : vector<16x192xf32> to vector<16x64xf32>
    %20 = vector.extract_strided_slice %18 {offsets = [0, 64], sizes = [16, 64], strides = [1, 1]} : vector<16x192xf32> to vector<16x64xf32>
    %21 = vector.extract_strided_slice %18 {offsets = [0, 128], sizes = [16, 64], strides = [1, 1]} : vector<16x192xf32> to vector<16x64xf32>
    %c0_13 = arith.constant 0 : index
    %c0_14 = arith.constant 0 : index
    %22 = vector.load %arg7[%c0_13, %c0_14] : memref<1x64xf32, #tpu.memory_space<vmem>>, vector<1x64xf32>
    %23 = vector.broadcast %22 : vector<1x64xf32> to vector<16x64xf32>
    %24 = arith.addf %21, %23 : vector<16x64xf32>
    %25 = arith.addf %14, %19 : vector<16x64xf32>
    %26 = arith.negf %25 : vector<16x64xf32>
    %27 = math.exp %26 : vector<16x64xf32>
    %cst_15 = arith.constant 1.000000e+00 : f32
    %28 = vector.broadcast %cst_15 : f32 to vector<16x64xf32>
    %29 = arith.addf %28, %27 : vector<16x64xf32>
    %30 = arith.divf %28, %29 : vector<16x64xf32>
    %31 = arith.addf %15, %20 : vector<16x64xf32>
    %32 = arith.negf %31 : vector<16x64xf32>
    %33 = math.exp %32 : vector<16x64xf32>
    %cst_16 = arith.constant 1.000000e+00 : f32
    %34 = vector.broadcast %cst_16 : f32 to vector<16x64xf32>
    %35 = arith.addf %34, %33 : vector<16x64xf32>
    %36 = arith.divf %34, %35 : vector<16x64xf32>
    %37 = arith.mulf %30, %24 : vector<16x64xf32>
    %38 = arith.addf %16, %37 : vector<16x64xf32>
    %39 = math.tanh %38 : vector<16x64xf32>
    %cst_17 = arith.constant 1.000000e+00 : f32
    %40 = vector.broadcast %cst_17 : f32 to vector<16x64xf32>
    %41 = arith.subf %40, %36 : vector<16x64xf32>
    %42 = arith.mulf %41, %39 : vector<16x64xf32>
    %43 = arith.mulf %36, %5 : vector<16x64xf32>
    %44 = arith.addf %42, %43 : vector<16x64xf32>
    %45 = arith.truncf %13 : vector<16x512xf32> to vector<16x512xbf16>
    %c0_18 = arith.constant 0 : index
    %c0_19 = arith.constant 0 : index
    %46 = vector.load %arg8[%c0_18, %c0_19] : memref<512x256xbf16, #tpu.memory_space<vmem>>, vector<512x256xbf16>
    %cst_20 = arith.constant dense<0.000000e+00> : vector<16x256xf32>
    %47 = tpu.matmul %45, %46, %cst_20 {dimension_numbers = #tpu.dot_dimension_numbers<[1], [0], [0], [1], [0, 0, 1, 1], [], []>} : vector<16x512xbf16>, vector<512x256xbf16>, vector<16x256xf32> -> vector<16x256xf32>
    %c0_21 = arith.constant 0 : index
    %c0_22 = arith.constant 0 : index
    %48 = vector.load %arg9[%c0_21, %c0_22] : memref<1x256xf32, #tpu.memory_space<vmem>>, vector<1x256xf32>
    %49 = vector.broadcast %48 : vector<1x256xf32> to vector<16x256xf32>
    %50 = arith.addf %47, %49 : vector<16x256xf32>
    %cst_23 = arith.constant 0.000000e+00 : f32
    %51 = vector.broadcast %cst_23 : f32 to vector<16x256xf32>
    %52 = arith.maximumf %50, %51 : vector<16x256xf32>
    %53 = arith.truncf %52 : vector<16x256xf32> to vector<16x256xbf16>
    %c0_24 = arith.constant 0 : index
    %c0_25 = arith.constant 0 : index
    %54 = vector.load %arg10[%c0_24, %c0_25] : memref<256x64xbf16, #tpu.memory_space<vmem>>, vector<256x64xbf16>
    %cst_26 = arith.constant dense<0.000000e+00> : vector<16x64xf32>
    %55 = tpu.matmul %53, %54, %cst_26 {dimension_numbers = #tpu.dot_dimension_numbers<[1], [0], [0], [1], [0, 0, 1, 1], [], []>} : vector<16x256xbf16>, vector<256x64xbf16>, vector<16x64xf32> -> vector<16x64xf32>
    %c0_27 = arith.constant 0 : index
    %c0_28 = arith.constant 0 : index
    %56 = vector.load %arg11[%c0_27, %c0_28] : memref<1x64xf32, #tpu.memory_space<vmem>>, vector<1x64xf32>
    %57 = vector.broadcast %56 : vector<1x64xf32> to vector<16x64xf32>
    %58 = arith.addf %55, %57 : vector<16x64xf32>
    %cst_29 = arith.constant 0.000000e+00 : f32
    %59 = vector.broadcast %cst_29 : f32 to vector<16x64xf32>
    %60 = arith.maximumf %58, %59 : vector<16x64xf32>
    %61 = arith.truncf %44 : vector<16x64xf32> to vector<16x64xbf16>
    %c0_30 = arith.constant 0 : index
    %c0_31 = arith.constant 0 : index
    %62 = vector.load %arg12[%c0_30, %c0_31] : memref<64x128xbf16, #tpu.memory_space<vmem>>, vector<64x128xbf16>
    %cst_32 = arith.constant dense<0.000000e+00> : vector<16x128xf32>
    %63 = tpu.matmul %61, %62, %cst_32 {dimension_numbers = #tpu.dot_dimension_numbers<[1], [0], [0], [1], [0, 0, 1, 1], [], []>} : vector<16x64xbf16>, vector<64x128xbf16>, vector<16x128xf32> -> vector<16x128xf32>
    %64 = arith.truncf %60 : vector<16x64xf32> to vector<16x64xbf16>
    %c0_33 = arith.constant 0 : index
    %c0_34 = arith.constant 0 : index
    %65 = vector.load %arg13[%c0_33, %c0_34] : memref<64x128xbf16, #tpu.memory_space<vmem>>, vector<64x128xbf16>
    %cst_35 = arith.constant dense<0.000000e+00> : vector<16x128xf32>
    %66 = tpu.matmul %64, %65, %cst_35 {dimension_numbers = #tpu.dot_dimension_numbers<[1], [0], [0], [1], [0, 0, 1, 1], [], []>} : vector<16x64xbf16>, vector<64x128xbf16>, vector<16x128xf32> -> vector<16x128xf32>
    %67 = arith.addf %63, %66 : vector<16x128xf32>
    %c0_36 = arith.constant 0 : index
    %c0_37 = arith.constant 0 : index
    %68 = vector.load %arg14[%c0_36, %c0_37] : memref<1x128xf32, #tpu.memory_space<vmem>>, vector<1x128xf32>
    %69 = vector.broadcast %68 : vector<1x128xf32> to vector<16x128xf32>
    %70 = arith.addf %67, %69 : vector<16x128xf32>
    %c0_38 = arith.constant 0 : index
    %c0_39 = arith.constant 0 : index
    %71 = vector.load %arg15[%c0_38, %c0_39] : memref<16x128xf32, #tpu.memory_space<vmem>>, vector<16x128xf32>
    tpu.vector_store %arg15[%c0_38, %c0_39], %70 {strides = array<i32>} : memref<16x128xf32, #tpu.memory_space<vmem>>, vector<16x128xf32>,
    %c0_40 = arith.constant 0 : index
    %c0_41 = arith.constant 0 : index
    %72 = vector.load %arg16[%c0_40, %c0_41] : memref<16x64xf32, #tpu.memory_space<vmem>>, vector<16x64xf32>
    tpu.vector_store %arg16[%c0_40, %c0_41], %44 {strides = array<i32>} : memref<16x64xf32, #tpu.memory_space<vmem>>, vector<16x64xf32>,
    return
  }
  func.func @transform_0(%arg0: i32) -> (i32, i32) {
    %c0_i32 = arith.constant 0 : i32
    %c0_i32_0 = arith.constant 0 : i32
    return %arg0, %c0_i32 : i32, i32
  }
  func.func @transform_1(%arg0: i32) -> (i32, i32) {
    %c0_i32 = arith.constant 0 : i32
    %c0_i32_0 = arith.constant 0 : i32
    return %arg0, %c0_i32 : i32, i32
  }
  func.func @transform_2(%arg0: i32) -> (i32, i32) {
    %c0_i32 = arith.constant 0 : i32
    %c0_i32_0 = arith.constant 0 : i32
    return %arg0, %c0_i32 : i32, i32
  }
  func.func @transform_3(%arg0: i32) -> (i32, i32) {
    %c0_i32 = arith.constant 0 : i32
    %c0_i32_0 = arith.constant 0 : i32
    %c0_i32_1 = arith.constant 0 : i32
    return %c0_i32, %c0_i32_0 : i32, i32
  }
  func.func @transform_4(%arg0: i32) -> (i32, i32) {
    %c0_i32 = arith.constant 0 : i32
    %c0_i32_0 = arith.constant 0 : i32
    %c0_i32_1 = arith.constant 0 : i32
    return %c0_i32, %c0_i32_0 : i32, i32
  }
  func.func @transform_5(%arg0: i32) -> (i32, i32) {
    %c0_i32 = arith.constant 0 : i32
    %c0_i32_0 = arith.constant 0 : i32
    %c0_i32_1 = arith.constant 0 : i32
    return %c0_i32, %c0_i32_0 : i32, i32
  }
  func.func @transform_6(%arg0: i32) -> (i32, i32) {
    %c0_i32 = arith.constant 0 : i32
    %c0_i32_0 = arith.constant 0 : i32
    %c0_i32_1 = arith.constant 0 : i32
    return %c0_i32, %c0_i32_0 : i32, i32
  }
  func.func @transform_7(%arg0: i32) -> (i32, i32) {
    %c0_i32 = arith.constant 0 : i32
    %c0_i32_0 = arith.constant 0 : i32
    %c0_i32_1 = arith.constant 0 : i32
    return %c0_i32, %c0_i32_0 : i32, i32
  }
  func.func @transform_8(%arg0: i32) -> (i32, i32) {
    %c0_i32 = arith.constant 0 : i32
    %c0_i32_0 = arith.constant 0 : i32
    %c0_i32_1 = arith.constant 0 : i32
    return %c0_i32, %c0_i32_0 : i32, i32
  }
  func.func @transform_9(%arg0: i32) -> (i32, i32) {
    %c0_i32 = arith.constant 0 : i32
    %c0_i32_0 = arith.constant 0 : i32
    %c0_i32_1 = arith.constant 0 : i32
    return %c0_i32, %c0_i32_0 : i32, i32
  }
  func.func @transform_10(%arg0: i32) -> (i32, i32) {
    %c0_i32 = arith.constant 0 : i32
    %c0_i32_0 = arith.constant 0 : i32
    %c0_i32_1 = arith.constant 0 : i32
    return %c0_i32, %c0_i32_0 : i32, i32
  }
  func.func @transform_11(%arg0: i32) -> (i32, i32) {
    %c0_i32 = arith.constant 0 : i32
    %c0_i32_0 = arith.constant 0 : i32
    %c0_i32_1 = arith.constant 0 : i32
    return %c0_i32, %c0_i32_0 : i32, i32
  }
  func.func @transform_12(%arg0: i32) -> (i32, i32) {
    %c0_i32 = arith.constant 0 : i32
    %c0_i32_0 = arith.constant 0 : i32
    %c0_i32_1 = arith.constant 0 : i32
    return %c0_i32, %c0_i32_0 : i32, i32
  }
  func.func @transform_13(%arg0: i32) -> (i32, i32) {
    %c0_i32 = arith.constant 0 : i32
    %c0_i32_0 = arith.constant 0 : i32
    %c0_i32_1 = arith.constant 0 : i32
    return %c0_i32, %c0_i32_0 : i32, i32
  }
  func.func @transform_14(%arg0: i32) -> (i32, i32) {
    %c0_i32 = arith.constant 0 : i32
    %c0_i32_0 = arith.constant 0 : i32
    return %arg0, %c0_i32 : i32, i32
  }
  func.func @transform_15(%arg0: i32) -> (i32, i32) {
    %c0_i32 = arith.constant 0 : i32
    %c0_i32_0 = arith.constant 0 : i32
    return %arg0, %c0_i32 : i32, i32
  }
}

</mosaic_0001>

<llo_original>
// kernel: tpu_custom_call.1
$region0: #{tpu_custom_call.1}
  #allocation0 [shape = 'u32[]', space=smem, size = 0x4, offset = 0x4, fixed_abs, tag = 'smem constant byte address 0x4 - core index']
  #allocation1 [shape = 'u32[144,128]{1,0:T(1,128)}', space=vmem, size = 0x12000, scoped, tag = 'internal scratch']
  %s0 = inlined_call_operand.vmem [shape: f32[16,73], index: 0, kind: input, shape index: {}]
  %s1 = inlined_call_operand.vmem [shape: f32[16,64], index: 1, kind: input, shape index: {}]
  %s2 = inlined_call_operand.vmem [shape: f32[16,1], index: 2, kind: input, shape index: {}]
  %s3 = inlined_call_operand.hbm [shape: bf16[73,704], index: 3, kind: input, shape index: {}]
  %s4 = inlined_call_operand.hbm [shape: f32[1,704], index: 4, kind: input, shape index: {}]
  %s5 = inlined_call_operand.vmem [shape: f32[64,192], index: 5, kind: input, shape index: {}]
  %s6 = inlined_call_operand.vmem [shape: f32[1,64], index: 6, kind: input, shape index: {}]
  %s7 = inlined_call_operand.hbm [shape: bf16[512,256], index: 7, kind: input, shape index: {}]
  %s8 = inlined_call_operand.vmem [shape: f32[1,256], index: 8, kind: input, shape index: {}]
  %s9 = inlined_call_operand.vmem [shape: bf16[256,64], index: 9, kind: input, shape index: {}]
  %s10 = inlined_call_operand.vmem [shape: f32[1,64], index: 10, kind: input, shape index: {}]
  %s11 = inlined_call_operand.vmem [shape: bf16[64,128], index: 11, kind: input, shape index: {}]
  %s12 = inlined_call_operand.vmem [shape: bf16[64,128], index: 12, kind: input, shape index: {}]
  %s13 = inlined_call_operand.vmem [shape: f32[1,128], index: 13, kind: input, shape index: {}]
  %s14 = inlined_call_operand.hbm [shape: f32[16,128], index: 14, kind: output, shape index: {0}]
  %s15 = inlined_call_operand.hbm [shape: f32[16,64], index: 15, kind: output, shape index: {1}]
  %16 = xla_tuple %s14, %s15
  %s17 = sld [smem:[#allocation0]]
  $region86: #{tpu_custom_call.1} parent=0
    _
  %s19 = ssub.s32 1, %s17
  %s20 = scalar_select 0, %s19, %s17
  $region1: #{tpu_custom_call.1} parent=0
    #allocation2 [shape = 'u8[122880]{0}', space=vmem, size = 0x1e000, scoped, tag = 'input window, operand 3, single buffered']
    #allocation3 [shape = 's32[1]{0}', space=sflag, size = 0x4, scoped, tag = 'scoped memory for tpu_custom_call.1']
    #allocation4 [shape = 's32[1]{0}', space=sflag, size = 0x4, scoped, tag = 'scoped memory for tpu_custom_call.1']
    #allocation5 [shape = 'u8[3072]{0}', space=vmem, size = 0xc00, scoped, tag = 'input window, operand 4, single buffered']
    #allocation6 [shape = 's32[1]{0}', space=sflag, size = 0x4, scoped, tag = 'scoped memory for tpu_custom_call.1']
    #allocation7 [shape = 'u8[262144]{0}', space=vmem, size = 0x40000, scoped, tag = 'input window, operand 7, single buffered']
    #allocation8 [shape = 'u8[8192]{0}', space=vmem, size = 0x2000, scoped, tag = 'output window, operand 0, single buffered']
    #allocation9 [shape = 'u8[8192]{0}', space=vmem, size = 0x2000, scoped, tag = 'output window, operand 1, single buffered']
    #allocation10 [shape = 's32[1]{0}', space=sflag, size = 0x4, scoped, tag = 'scoped memory for tpu_custom_call.1']
    %21 = vsyncpa [#allocation3], 0
    %22 = vsyncpa [#allocation6], 0
    %23 = vsyncpa [#allocation4], 0
    %24 = vsyncpa [#allocation10], 0
    // Predicated region
    $region2: #{tpu_custom_call.1} parent=1 // pred_check
      _
    $region3: #{tpu_custom_call.1} parent=1 // pred_check_branch
      %26 = sbr.rel (0) target = $region5
    $region4: #{tpu_custom_call.1} parent=1 // pred_region
      _
    $region5: #{tpu_custom_call.1} parent=1 // pred_fallthru
      _
    // Predicated region
    $region6: #{tpu_custom_call.1} parent=1 // pred_check
      _
    $region7: #{tpu_custom_call.1} parent=1 // pred_check_branch
      %28 = sbr.rel (0) target = $region9
    $region8: #{tpu_custom_call.1} parent=1 // pred_region
      _
    $region9: #{tpu_custom_call.1} parent=1 // pred_fallthru
      _
    // Predicated region
    $region10: #{tpu_custom_call.1} parent=1 // pred_check
      _
    $region11: #{tpu_custom_call.1} parent=1 // pred_check_branch
      %30 = sbr.rel (0) target = $region13
    $region12: #{tpu_custom_call.1} parent=1 // pred_region
      _
    $region13: #{tpu_custom_call.1} parent=1 // pred_fallthru
      _
    // Predicated region
    $region14: #{tpu_custom_call.1} parent=1 // pred_check
      _
    $region15: #{tpu_custom_call.1} parent=1 // pred_check_branch
      %32 = sbr.rel (0) target = $region17
    $region16: #{tpu_custom_call.1} parent=1 // pred_region
      %s34 = ssub.s32 3840, 3840
      %35 = vsyncadd [#allocation3], %s34
      %s36 = sshll.u32 [#allocation2], 4
      %s37 = int_to_ptr.vmem [resolvable:$true] %s36
      %42 = dma.hbm_to_vmem [thread:$0]  %s3, 3840, %s37, [#allocation3], 384, 384, 24
    $region17: #{tpu_custom_call.1} parent=1 // pred_fallthru
      _
    // Predicated region
    $region18: #{tpu_custom_call.1} parent=1 // pred_check
      _
    $region19: #{tpu_custom_call.1} parent=1 // pred_check_branch
      %44 = sbr.rel (0) target = $region21
    $region20: #{tpu_custom_call.1} parent=1 // pred_region
      %s46 = ssub.s32 96, 96
      %47 = vsyncadd [#allocation6], %s46
      %s49 = sshll.u32 [#allocation5], 4
      %s50 = int_to_ptr.vmem [resolvable:$true] %s49
      %52 = dma.hbm_to_vmem [thread:$0]  %s4, 96, %s50, [#allocation6]
    $region21: #{tpu_custom_call.1} parent=1 // pred_fallthru
      _
    // Predicated region
    $region22: #{tpu_custom_call.1} parent=1 // pred_check
      _
    $region23: #{tpu_custom_call.1} parent=1 // pred_check_branch
      %54 = sbr.rel (0) target = $region25
    $region24: #{tpu_custom_call.1} parent=1 // pred_region
      _
    $region25: #{tpu_custom_call.1} parent=1 // pred_fallthru
      _
    // Predicated region
    $region26: #{tpu_custom_call.1} parent=1 // pred_check
      _
    $region27: #{tpu_custom_call.1} parent=1 // pred_check_branch
      %56 = sbr.rel (0) target = $region29
    $region28: #{tpu_custom_call.1} parent=1 // pred_region
      _
    $region29: #{tpu_custom_call.1} parent=1 // pred_fallthru
      _
    // Predicated region
    $region30: #{tpu_custom_call.1} parent=1 // pred_check
      _
    $region31: #{tpu_custom_call.1} parent=1 // pred_check_branch
      %58 = sbr.rel (0) target = $region33
    $region32: #{tpu_custom_call.1} parent=1 // pred_region
      %s60 = ssub.s32 8192, 8192
      %61 = vsyncadd [#allocation6], %s60
      %s62 = sshll.u32 [#allocation7], 4
      %s63 = int_to_ptr.vmem [resolvable:$true] %s62
      %68 = dma.hbm_to_vmem [thread:$0]  %s7, 8192, %s63, [#allocation6], 128, 128, 8
    $region33: #{tpu_custom_call.1} parent=1 // pred_fallthru
      _
    // Predicated region
    $region34: #{tpu_custom_call.1} parent=1 // pred_check
      _
    $region35: #{tpu_custom_call.1} parent=1 // pred_check_branch
      %70 = sbr.rel (0) target = $region37
    $region36: #{tpu_custom_call.1} parent=1 // pred_region
      _
    $region37: #{tpu_custom_call.1} parent=1 // pred_fallthru
      _
    // Predicated region
    $region38: #{tpu_custom_call.1} parent=1 // pred_check
      _
    $region39: #{tpu_custom_call.1} parent=1 // pred_check_branch
      %72 = sbr.rel (0) target = $region41
    $region40: #{tpu_custom_call.1} parent=1 // pred_region
      _
    $region41: #{tpu_custom_call.1} parent=1 // pred_fallthru
      _
    // Predicated region
    $region42: #{tpu_custom_call.1} parent=1 // pred_check
      _
    $region43: #{tpu_custom_call.1} parent=1 // pred_check_branch
      %74 = sbr.rel (0) target = $region45
    $region44: #{tpu_custom_call.1} parent=1 // pred_region
      _
    $region45: #{tpu_custom_call.1} parent=1 // pred_fallthru
      _
    // Predicated region
    $region46: #{tpu_custom_call.1} parent=1 // pred_check
      _
    $region47: #{tpu_custom_call.1} parent=1 // pred_check_branch
      %76 = sbr.rel (0) target = $region49
    $region48: #{tpu_custom_call.1} parent=1 // pred_region
      _
    $region49: #{tpu_custom_call.1} parent=1 // pred_fallthru
      _
    // Predicated region
    $region50: #{tpu_custom_call.1} parent=1 // pred_check
      _
    $region51: #{tpu_custom_call.1} parent=1 // pred_check_branch
      %78 = sbr.rel (0) target = $region53
    $region52: #{tpu_custom_call.1} parent=1 // pred_region
      _
    $region53: #{tpu_custom_call.1} parent=1 // pred_fallthru
      _
    // Predicated region
    $region54: #{tpu_custom_call.1} parent=1 // pred_check
      _
    $region55: #{tpu_custom_call.1} parent=1 // pred_check_branch
      %80 = sbr.rel (0) target = $region57
    $region56: #{tpu_custom_call.1} parent=1 // pred_region
      _
    $region57: #{tpu_custom_call.1} parent=1 // pred_fallthru
      _
    // Predicated region
    $region58: #{tpu_custom_call.1} parent=1 // pred_check
      _
    $region59: #{tpu_custom_call.1} parent=1 // pred_check_branch
      %82 = sbr.rel (0) target = $region61
    $region60: #{tpu_custom_call.1} parent=1 // pred_region
      %83 = dma.done [#allocation3], 3840
    $region61: #{tpu_custom_call.1} parent=1 // pred_fallthru
      _
    // Predicated region
    $region62: #{tpu_custom_call.1} parent=1 // pred_check
      _
    $region63: #{tpu_custom_call.1} parent=1 // pred_check_branch
      %85 = sbr.rel (0) target = $region65
    $region64: #{tpu_custom_call.1} parent=1 // pred_region
      %86 = dma.done [#allocation6], 96
    $region65: #{tpu_custom_call.1} parent=1 // pred_fallthru
      _
    // Predicated region
    $region66: #{tpu_custom_call.1} parent=1 // pred_check
      _
    $region67: #{tpu_custom_call.1} parent=1 // pred_check_branch
      %88 = sbr.rel (0) target = $region69
    $region68: #{tpu_custom_call.1} parent=1 // pred_region
      %89 = dma.done [#allocation6], 8192
    $region69: #{tpu_custom_call.1} parent=1 // pred_fallthru
      _
    %v91 = vld [vmem:[%s0] sm:$0xff]
    %v92 = vld [vmem:[%s0 + $0x8] sm:$0xff]
    %v93 = vpack.c.bf16 %v92, %v91
    %v94 = vld [vmem:[%s1] sm:$0xff]
    %v95 = vld [vmem:[%s1 + $0x8] sm:$0xff]
    %v96 = vld [vmem:[%s2] sm:$0xff]
    %v97 = vld [vmem:[%s2 + $0x8] sm:$0xff]
    %99 = vset.pattern.permute.xlu0 0
    %100 = vperm.xlu0 %99, %v96
    %v101 = vpop.permute.xlu0 %100
    %104 = vset.pattern.permute.xlu0 0
    %105 = vperm.xlu0 %104, %v97
    %v106 = vpop.permute.xlu0 %105
    %v108 = vmul.f32 %v94, %v101
    %v109 = vmul.f32 %v95, %v106
    %v110 = vld [vmem:[#allocation2] sm:$0xff]
    %v111 = vld [vmem:[#allocation2 + $0x8] sm:$0xff]
    %v112 = vld [vmem:[#allocation2 + $0x10] sm:$0xff]
    %v113 = vld [vmem:[#allocation2 + $0x18] sm:$0xff]
    %v114 = vld [vmem:[#allocation2 + $0x20] sm:$0xff]
    %v115 = vld [vmem:[#allocation2 + $0x28] sm:$0xff]
    %v116 = vld [vmem:[#allocation2 + $0x30] sm:$0xff]
    %v117 = vld [vmem:[#allocation2 + $0x38] sm:$0xff]
    %v118 = vld [vmem:[#allocation2 + $0x40] sm:$0xff]
    %v119 = vld [vmem:[#allocation2 + $0x48] sm:$0xff]
    %v120 = vld [vmem:[#allocation2 + $0x50] sm:$0xff]
    %v121 = vld [vmem:[#allocation2 + $0x58] sm:$0xff]
    %v122 = vld [vmem:[#allocation2 + $0x60] sm:$0xff]
    %v123 = vld [vmem:[#allocation2 + $0x68] sm:$0xff]
    %v124 = vld [vmem:[#allocation2 + $0x70] sm:$0xff]
    %v125 = vld [vmem:[#allocation2 + $0x78] sm:$0xff]
    %v126 = vld [vmem:[#allocation2 + $0x80] sm:$0xff]
    %v127 = vld [vmem:[#allocation2 + $0x88] sm:$0xff]
    %v128 = vld [vmem:[#allocation2 + $0x90] sm:$0xff]
    %v129 = vld [vmem:[#allocation2 + $0x98] sm:$0xff]
    %v130 = vld [vmem:[#allocation2 + $0xa0] sm:$0xff]
    %v131 = vld [vmem:[#allocation2 + $0xa8] sm:$0xff]
    %v132 = vld [vmem:[#allocation2 + $0xb0] sm:$0xff]
    %v133 = vld [vmem:[#allocation2 + $0xb8] sm:$0xff]
    %v134 = vld [vmem:[#allocation2 + $0xc0] sm:$0xff]
    %v135 = vld [vmem:[#allocation2 + $0xc8] sm:$0xff]
    %v136 = vld [vmem:[#allocation2 + $0xd0] sm:$0xff]
    %v137 = vld [vmem:[#allocation2 + $0xd8] sm:$0x11]
    %v138 = vld [vmem:[#allocation2 + $0xe0] sm:$0x11]
    %v139 = vld [vmem:[#allocation2 + $0xe8] sm:$0x11]
    %v140 = vld [vmem:[#allocation5] sm:$0x3f]
    %v142 = vlaneseq
    %v143 = vshrl.u32 %v142, 7
    %v144 = vsub.s32 0, %v143
    %v145 = vrot.slane %v140, %v144
    %v146 = vlaneseq
    %v147 = vshrl.u32 %v146, 7
    %v148 = vsub.s32 1, %v147
    %v149 = vrot.slane %v140, %v148
    %v150 = vlaneseq
    %v151 = vshrl.u32 %v150, 7
    %v152 = vsub.s32 2, %v151
    %v153 = vrot.slane %v140, %v152
    %v154 = vlaneseq
    %v155 = vshrl.u32 %v154, 7
    %v156 = vsub.s32 3, %v155
    %v157 = vrot.slane %v140, %v156
    %v158 = vlaneseq
    %v159 = vshrl.u32 %v158, 7
    %v160 = vsub.s32 4, %v159
    %v161 = vrot.slane %v140, %v160
    %v162 = vlaneseq
    %v163 = vshrl.u32 %v162, 7
    %v164 = vsub.s32 5, %v163
    %v165 = vrot.slane %v140, %v164
    %v202 = vunpack.c.l.b16 %v110
    %v203 = vunpack.c.h.b16 %v110
    %v204 = vunpack.c.l.b16 %v111
    %v205 = vunpack.c.h.b16 %v111
    %v206 = vunpack.c.l.b16 %v112
    %v207 = vunpack.c.h.b16 %v112
    %v208 = vunpack.c.l.b16 %v113
    %v209 = vunpack.c.h.b16 %v113
    %v210 = vunpack.c.l.b16 %v114
    %v211 = vunpack.c.h.b16 %v114
    %v212 = vunpack.c.l.b16 %v115
    %v213 = vunpack.c.h.b16 %v115
    %v214 = vunpack.c.l.b16 %v116
    %v215 = vunpack.c.h.b16 %v116
    %v216 = vunpack.c.l.b16 %v117
    %v217 = vunpack.c.h.b16 %v117
    %v218 = vunpack.c.l.b16 %v118
    %v219 = vunpack.c.h.b16 %v118
    %v220 = vunpack.c.l.b16 %v119
    %v221 = vunpack.c.h.b16 %v119
    %v222 = vunpack.c.l.b16 %v120
    %v223 = vunpack.c.h.b16 %v120
    %v224 = vunpack.c.l.b16 %v121
    %v225 = vunpack.c.h.b16 %v121
    %v226 = vunpack.c.l.b16 %v122
    %v227 = vunpack.c.h.b16 %v122
    %v228 = vunpack.c.l.b16 %v123
    %v229 = vunpack.c.h.b16 %v123
    %v230 = vunpack.c.l.b16 %v124
    %v231 = vunpack.c.h.b16 %v124
    %v232 = vunpack.c.l.b16 %v125
    %v233 = vunpack.c.h.b16 %v125
    %v234 = vunpack.c.l.b16 %v126
    %v235 = vunpack.c.h.b16 %v126
    %v236 = vunpack.c.l.b16 %v127
    %v237 = vunpack.c.h.b16 %v127
    %v238 = vunpack.c.l.b16 %v128
    %v239 = vunpack.c.h.b16 %v128
    %v240 = vunpack.c.l.b16 %v129
    %v241 = vunpack.c.h.b16 %v129
    %v242 = vunpack.c.l.b16 %v130
    %v243 = vunpack.c.h.b16 %v130
    %v244 = vunpack.c.l.b16 %v131
    %v245 = vunpack.c.h.b16 %v131
    %v246 = vunpack.c.l.b16 %v132
    %v247 = vunpack.c.h.b16 %v132
    %v248 = vunpack.c.l.b16 %v133
    %v249 = vunpack.c.h.b16 %v133
    %v250 = vunpack.c.l.b16 %v134
    %v251 = vunpack.c.h.b16 %v134
    %v252 = vunpack.c.l.b16 %v135
    %v253 = vunpack.c.h.b16 %v135
    %v254 = vunpack.c.l.b16 %v136
    %v255 = vunpack.c.h.b16 %v136
    %v256 = vunpack.c.l.b16 %v137
    %v257 = vunpack.c.h.b16 %v137
    %v258 = vunpack.c.l.b16 %v138
    %v259 = vunpack.c.h.b16 %v138
    %v260 = vunpack.c.l.b16 %v139
    %v261 = vunpack.c.h.b16 %v139
    %v262 = vpack.c.b16 %v208, %v202
    %v263 = vpack.c.b16 %v209, %v203
    %v264 = vpack.c.b16 %v210, %v204
    %v265 = vpack.c.b16 %v211, %v205
    %v266 = vpack.c.b16 %v212, %v206
    %v267 = vpack.c.b16 %v213, %v207
    %v268 = vpack.c.b16 %v220, %v214
    %v269 = vpack.c.b16 %v221, %v215
    %v270 = vpack.c.b16 %v222, %v216
    %v271 = vpack.c.b16 %v223, %v217
    %v272 = vpack.c.b16 %v224, %v218
    %v273 = vpack.c.b16 %v225, %v219
    %v274 = vpack.c.b16 %v232, %v226
    %v275 = vpack.c.b16 %v233, %v227
    %v276 = vpack.c.b16 %v234, %v228
    %v277 = vpack.c.b16 %v235, %v229
    %v278 = vpack.c.b16 %v236, %v230
    %v279 = vpack.c.b16 %v237, %v231
    %v280 = vpack.c.b16 %v244, %v238
    %v281 = vpack.c.b16 %v245, %v239
    %v282 = vpack.c.b16 %v246, %v240
    %v283 = vpack.c.b16 %v247, %v241
    %v284 = vpack.c.b16 %v248, %v242
    %v285 = vpack.c.b16 %v249, %v243
    %v286 = vpack.c.b16 %v256, %v250
    %v287 = vpack.c.b16 %v257, %v251
    %v288 = vpack.c.b16 %v258, %v252
    %v289 = vpack.c.b16 %v259, %v253
    %v290 = vpack.c.b16 %v260, %v254
    %v291 = vpack.c.b16 %v261, %v255
    %vm316 = vcmask 596992
    %v318 = vsel %vm316, %v93, 0
    %vm320 = vcmask 1043456
    %vm321 = vcmask 1044480
    %v322 = vsel %vm320, 4294967295, 65535
    %v323 = vsel %vm321, %v322, 0
    %v325 = vand.u32 %v286, %v323
    %v328 = vand.u32 %v287, %v323
    %v331 = vand.u32 %v288, %v323
    %v334 = vand.u32 %v289, %v323
    %v337 = vand.u32 %v290, %v323
    %v340 = vand.u32 %v291, %v323
    %342 = vmatprep.subr.bf16.mxu0 %v263
    %343 = vmatpush1.bf16.msra.mxu0 %v262
    %344 = vmatprep.subr.bf16.mxu0 %v269
    %345 = vmatpush1.bf16.msra.mxu0 %v268
    %346 = vmatprep.subr.bf16.mxu0 %v275
    %347 = vmatpush1.bf16.msra.mxu0 %v274
    %348 = vmatprep.subr.bf16.mxu0 %v281
    %349 = vmatpush1.bf16.msra.mxu0 %v280
    %350 = vmatprep.subr.bf16.mxu0 %v328
    %351 = vmatpush1.bf16.msra.mxu0 %v325
    %352 = vmatprep.subr.bf16.mxu0 0
    %353 = vmatpush1.bf16.msra.mxu0 0
    %354 = vmatprep.subr.bf16.mxu0 0
    %355 = vmatpush1.bf16.msra.mxu0 0
    %356 = vmatprep.subr.bf16.mxu0 0
    %357 = vmatpush1.bf16.msra.mxu0 0
    %358 = vmatprep.subr.bf16.mxu0 0
    %359 = vmatpush1.bf16.msra.mxu0 0
    %360 = vmatprep.subr.bf16.mxu0 0
    %361 = vmatpush1.bf16.msra.mxu0 0
    %362 = vmatprep.subr.bf16.mxu0 0
    %363 = vmatpush1.bf16.msra.mxu0 0
    %364 = vmatprep.subr.bf16.mxu0 0
    %365 = vmatpush1.bf16.msra.mxu0 0
    %366 = vmatprep.subr.bf16.mxu0 0
    %367 = vmatpush1.bf16.msra.mxu0 0
    %368 = vmatprep.subr.bf16.mxu0 0
    %369 = vmatpush1.bf16.msra.mxu0 0
    %370 = vmatprep.subr.bf16.mxu0 0
    %371 = vmatpush1.bf16.msra.mxu0 0
    %372 = vmatprep.subr.bf16.mxu0 0
    %373 = vmatpush1.bf16.msra.mxu0 0
    %374 = vmatprep.mubr.bf16.mxu0 0
    %375 = vmatmul.mubr.bf16.gmra.mrb[0].mxu0 %v318
    %v376 = vpop.f32.mrb[0].mxu0
    %v377 = vadd.f32 %v145, %v376
    %v378 = vpop.f32.mrb[0].mxu0
    %v379 = vadd.f32 %v149, %v378
    %v380 = vpop.f32.mrb[0].mxu0
    %v381 = vadd.f32 %v145, %v380
    %v382 = vpop.f32.mrb[0].mxu0
    %v383 = vadd.f32 %v149, %v382
    %384 = vdwg.mxu0
    %385 = vmatprep.subr.bf16.mxu0 %v265
    %386 = vmatpush1.bf16.msra.mxu0 %v264
    %387 = vmatprep.subr.bf16.mxu0 %v271
    %388 = vmatpush1.bf16.msra.mxu0 %v270
    %389 = vmatprep.subr.bf16.mxu0 %v277
    %390 = vmatpush1.bf16.msra.mxu0 %v276
    %391 = vmatprep.subr.bf16.mxu0 %v283
    %392 = vmatpush1.bf16.msra.mxu0 %v282
    %393 = vmatprep.subr.bf16.mxu0 %v334
    %394 = vmatpush1.bf16.msra.mxu0 %v331
    %395 = vmatprep.subr.bf16.mxu0 0
    %396 = vmatpush1.bf16.msra.mxu0 0
    %397 = vmatprep.subr.bf16.mxu0 0
    %398 = vmatpush1.bf16.msra.mxu0 0
    %399 = vmatprep.subr.bf16.mxu0 0
    %400 = vmatpush1.bf16.msra.mxu0 0
    %401 = vmatprep.subr.bf16.mxu0 0
    %402 = vmatpush1.bf16.msra.mxu0 0
    %403 = vmatprep.subr.bf16.mxu0 0
    %404 = vmatpush1.bf16.msra.mxu0 0
    %405 = vmatprep.subr.bf16.mxu0 0
    %406 = vmatpush1.bf16.msra.mxu0 0
    %407 = vmatprep.subr.bf16.mxu0 0
    %408 = vmatpush1.bf16.msra.mxu0 0
    %409 = vmatprep.subr.bf16.mxu0 0
    %410 = vmatpush1.bf16.msra.mxu0 0
    %411 = vmatprep.subr.bf16.mxu0 0
    %412 = vmatpush1.bf16.msra.mxu0 0
    %413 = vmatprep.subr.bf16.mxu0 0
    %414 = vmatpush1.bf16.msra.mxu0 0
    %415 = vmatprep.subr.bf16.mxu0 0
    %416 = vmatpush1.bf16.msra.mxu0 0
    %417 = vmatprep.mubr.bf16.mxu0 0
    %418 = vmatmul.mubr.bf16.gmra.mrb[0].mxu0 %v318
    %v419 = vpop.f32.mrb[0].mxu0
    %v420 = vadd.f32 %v153, %v419
    %v421 = vpop.f32.mrb[0].mxu0
    %v422 = vadd.f32 %v157, %v421
    %v423 = vpop.f32.mrb[0].mxu0
    %v424 = vadd.f32 %v153, %v423
    %v425 = vpop.f32.mrb[0].mxu0
    %v426 = vadd.f32 %v157, %v425
    %427 = vdwg.mxu0
    %428 = vmatprep.subr.bf16.mxu0 %v267
    %429 = vmatpush1.bf16.msra.mxu0 %v266
    %430 = vmatprep.subr.bf16.mxu0 %v273
    %431 = vmatpush1.bf16.msra.mxu0 %v272
    %432 = vmatprep.subr.bf16.mxu0 %v279
    %433 = vmatpush1.bf16.msra.mxu0 %v278
    %434 = vmatprep.subr.bf16.mxu0 %v285
    %435 = vmatpush1.bf16.msra.mxu0 %v284
    %436 = vmatprep.subr.bf16.mxu0 %v340
    %437 = vmatpush1.bf16.msra.mxu0 %v337
    %438 = vmatprep.subr.bf16.mxu0 0
    %439 = vmatpush1.bf16.msra.mxu0 0
    %440 = vmatprep.subr.bf16.mxu0 0
    %441 = vmatpush1.bf16.msra.mxu0 0
    %442 = vmatprep.subr.bf16.mxu0 0
    %443 = vmatpush1.bf16.msra.mxu0 0
    %444 = vmatprep.subr.bf16.mxu0 0
    %445 = vmatpush1.bf16.msra.mxu0 0
    %446 = vmatprep.subr.bf16.mxu0 0
    %447 = vmatpush1.bf16.msra.mxu0 0
    %448 = vmatprep.subr.bf16.mxu0 0
    %449 = vmatpush1.bf16.msra.mxu0 0
    %450 = vmatprep.subr.bf16.mxu0 0
    %451 = vmatpush1.bf16.msra.mxu0 0
    %452 = vmatprep.subr.bf16.mxu0 0
    %453 = vmatpush1.bf16.msra.mxu0 0
    %454 = vmatprep.subr.bf16.mxu0 0
    %455 = vmatpush1.bf16.msra.mxu0 0
    %456 = vmatprep.subr.bf16.mxu0 0
    %457 = vmatpush1.bf16.msra.mxu0 0
    %458 = vmatprep.subr.bf16.mxu0 0
    %459 = vmatpush1.bf16.msra.mxu0 0
    %460 = vmatprep.mubr.bf16.mxu0 0
    %461 = vmatmul.mubr.bf16.gmra.mrb[0].mxu0 %v318
    %v462 = vpop.f32.mrb[0].mxu0
    %v463 = vadd.f32 %v161, %v462
    %v464 = vpop.f32.mrb[0].mxu0
    %v465 = vadd.f32 %v165, %v464
    %v466 = vpop.f32.mrb[0].mxu0
    %v467 = vadd.f32 %v161, %v466
    %v468 = vpop.f32.mrb[0].mxu0
    %v469 = vadd.f32 %v165, %v468
    %470 = vdwg.mxu0
    %v471 = vmax.f32 %v377, 0.0
    %v472 = vmax.f32 %v379, 0.0
    %v473 = vmax.f32 %v420, 0.0
    %v474 = vmax.f32 %v422, 0.0
    %v475 = vmax.f32 %v381, 0.0
    %v476 = vmax.f32 %v383, 0.0
    %v477 = vmax.f32 %v424, 0.0
    %v478 = vmax.f32 %v426, 0.0
    %v479 = vld [vmem:[%s5] sm:$0xff]
    %v480 = vld [vmem:[%s5 + $0x8] sm:$0xff]
    %v481 = vld [vmem:[%s5 + $0x10] sm:$0xff]
    %v482 = vld [vmem:[%s5 + $0x18] sm:$0xff]
    %v483 = vld [vmem:[%s5 + $0x20] sm:$0xff]
    %v484 = vld [vmem:[%s5 + $0x28] sm:$0xff]
    %v485 = vld [vmem:[%s5 + $0x30] sm:$0xff]
    %v486 = vld [vmem:[%s5 + $0x38] sm:$0xff]
    %v487 = vld [vmem:[%s5 + $0x40] sm:$0xff]
    %v488 = vld [vmem:[%s5 + $0x48] sm:$0xff]
    %v489 = vld [vmem:[%s5 + $0x50] sm:$0xff]
    %v490 = vld [vmem:[%s5 + $0x58] sm:$0xff]
    %v491 = vld [vmem:[%s5 + $0x60] sm:$0xff]
    %v492 = vld [vmem:[%s5 + $0x68] sm:$0xff]
    %v493 = vld [vmem:[%s5 + $0x70] sm:$0xff]
    %v494 = vld [vmem:[%s5 + $0x78] sm:$0xff]
    %vm495 = vcmask 523264
    %v497 = vsel %vm495, %v108, 0
    %v500 = vsel %vm495, %v109, 0
    %502 = vmatprep.subr.mxu0 %v480
    %503 = vmatpush1.msra.mxu0 %v479
    %504 = vmatprep.subr.mxu0 %v482
    %505 = vmatpush1.msra.mxu0 %v481
    %506 = vmatprep.subr.mxu0 %v484
    %507 = vmatpush1.msra.mxu0 %v483
    %508 = vmatprep.subr.mxu0 %v486
    %509 = vmatpush1.msra.mxu0 %v485
    %510 = vmatprep.subr.mxu0 %v488
    %511 = vmatpush1.msra.mxu0 %v487
    %512 = vmatprep.subr.mxu0 %v490
    %513 = vmatpush1.msra.mxu0 %v489
    %514 = vmatprep.subr.mxu0 %v492
    %515 = vmatpush1.msra.mxu0 %v491
    %516 = vmatprep.subr.mxu0 %v494
    %517 = vmatpush1.msra.mxu0 %v493
    %518 = vmatprep.subr.mxu0 0.0
    %519 = vmatpush1.msra.mxu0 0.0
    %520 = vmatprep.subr.mxu0 0.0
    %521 = vmatpush1.msra.mxu0 0.0
    %522 = vmatprep.subr.mxu0 0.0
    %523 = vmatpush1.msra.mxu0 0.0
    %524 = vmatprep.subr.mxu0 0.0
    %525 = vmatpush1.msra.mxu0 0.0
    %526 = vmatprep.subr.mxu0 0.0
    %527 = vmatpush1.msra.mxu0 0.0
    %528 = vmatprep.subr.mxu0 0.0
    %529 = vmatpush1.msra.mxu0 0.0
    %530 = vmatprep.subr.mxu0 0.0
    %531 = vmatpush1.msra.mxu0 0.0
    %532 = vmatprep.subr.mxu0 0.0
    %533 = vmatpush1.msra.mxu0 0.0
    %534 = vmatprep.subr.mxu0 0.0
    %535 = vmatpush1.msra.mxu0 0.0
    %536 = vmatprep.subr.mxu0 0.0
    %537 = vmatpush1.msra.mxu0 0.0
    %538 = vmatprep.subr.mxu0 0.0
    %539 = vmatpush1.msra.mxu0 0.0
    %540 = vmatprep.subr.mxu0 0.0
    %541 = vmatpush1.msra.mxu0 0.0
    %542 = vmatprep.subr.mxu0 0.0
    %543 = vmatpush1.msra.mxu0 0.0
    %544 = vmatprep.subr.mxu0 0.0
    %545 = vmatpush1.msra.mxu0 0.0
    %546 = vmatprep.subr.mxu0 0.0
    %547 = vmatpush1.msra.mxu0 0.0
    %548 = vmatprep.subr.mxu0 0.0
    %549 = vmatpush1.msra.mxu0 0.0
    %550 = vmatprep.subr.mxu0 0.0
    %551 = vmatpush1.msra.mxu0 0.0
    %552 = vmatprep.subr.mxu0 0.0
    %553 = vmatpush1.msra.mxu0 0.0
    %554 = vmatprep.subr.mxu0 0.0
    %555 = vmatpush1.msra.mxu0 0.0
    %556 = vmatprep.subr.mxu0 0.0
    %557 = vmatpush1.msra.mxu0 0.0
    %558 = vmatprep.subr.mxu0 0.0
    %559 = vmatpush1.msra.mxu0 0.0
    %560 = vmatprep.subr.mxu0 0.0
    %561 = vmatpush1.msra.mxu0 0.0
    %562 = vmatprep.subr.mxu0 0.0
    %563 = vmatpush1.msra.mxu0 0.0
    %564 = vmatprep.subr.mxu0 0.0
    %565 = vmatpush1.msra.mxu0 0.0
    %566 = vmatprep.mubr.f32.mxu0 0.0
    %567 = vmatmul.mubr.f32.gmra.mrb[0].mxu0 %v497
    %v568 = vpop.f32.mrb[0].mxu0
    %v569 = vadd.f32 0.0, %v568
    %v570 = vpop.f32.mrb[0].mxu0
    %v571 = vadd.f32 0.0, %v570
    %572 = vmatprep.mubr.f32.mxu0 0.0
    %573 = vmatmul.mubr.f32.gmra.mrb[0].mxu0 %v500
    %v574 = vpop.f32.mrb[0].mxu0
    %v575 = vadd.f32 0.0, %v574
    %v576 = vpop.f32.mrb[0].mxu0
    %v577 = vadd.f32 0.0, %v576
    %578 = vdwg.mxu0
    %v579 = vld [vmem:[%s6] sm:$0x1]
    %v581 = vlaneseq
    %v582 = vshrl.u32 %v581, 7
    %v583 = vsub.s32 0, %v582
    %v584 = vrot.slane %v579, %v583
    %v586 = vadd.f32 %v571, %v584
    %v587 = vadd.f32 %v577, %v584
    %v588 = vadd.f32 %v463, %v569
    %v589 = vadd.f32 %v467, %v575
    %v590 = vxor.u32 %v588, 2147483648
    %v591 = vxor.u32 %v589, 2147483648
    %v592 = vmul.f32 %v590, 1.442695
    %v593 = vpow.pop %v592
    %v594 = vmul.f32 %v591, 1.442695
    %v595 = vpow.pop %v594
    %v596 = vadd.f32 %v593, 1.0
    %v597 = vadd.f32 %v595, 1.0
    %v598 = vrcp.pop %v596
    %v599 = vmul.f32 1.0, %v598
    %v600 = vrcp.pop %v597
    %v601 = vmul.f32 1.0, %v600
    %v602 = vmul.f32 %v599, %v586
    %v603 = vmul.f32 %v601, %v587
    %v604 = vadd.f32 %v465, %v602
    %v605 = vadd.f32 %v469, %v603
    %v606 = vtanh.pop %v604
    %v607 = vtanh.pop %v605
    %v608 = vsub.f32 1.0, %v599
    %v609 = vsub.f32 1.0, %v601
    %612 = vrot.lane.b32.xlu0 %v606, 64
    %v613 = vpop.permute.xlu0 %612
    %614 = vrot.lane.b32.xlu0 %v607, 64
    %v615 = vpop.permute.xlu0 %614
    %v618 = vmul.f32 %v608, %v613
    %v619 = vmul.f32 %v609, %v615
    %620 = vrot.lane.b32.xlu0 %v108, 64
    %v621 = vpop.permute.xlu0 %620
    %622 = vrot.lane.b32.xlu0 %v109, 64
    %v623 = vpop.permute.xlu0 %622
    %v626 = vmul.f32 %v599, %v621
    %v627 = vmul.f32 %v601, %v623
    %v628 = vadd.f32 %v618, %v626
    %v629 = vadd.f32 %v619, %v627
    %v630 = vpack.c.bf16 %v475, %v471
    %v631 = vpack.c.bf16 %v476, %v472
    %v632 = vpack.c.bf16 %v477, %v473
    %v633 = vpack.c.bf16 %v478, %v474
    %v634 = vld [vmem:[#allocation7] sm:$0xff]
    %v635 = vld [vmem:[#allocation7 + $0x8] sm:$0xff]
    %v636 = vld [vmem:[#allocation7 + $0x10] sm:$0xff]
    %v637 = vld [vmem:[#allocation7 + $0x18] sm:$0xff]
    %v638 = vld [vmem:[#allocation7 + $0x20] sm:$0xff]
    %v639 = vld [vmem:[#allocation7 + $0x28] sm:$0xff]
    %v640 = vld [vmem:[#allocation7 + $0x30] sm:$0xff]
    %v641 = vld [vmem:[#allocation7 + $0x38] sm:$0xff]
    %v642 = vld [vmem:[#allocation7 + $0x40] sm:$0xff]
    %v643 = vld [vmem:[#allocation7 + $0x48] sm:$0xff]
    %v644 = vld [vmem:[#allocation7 + $0x50] sm:$0xff]
    %v645 = vld [vmem:[#allocation7 + $0x58] sm:$0xff]
    %v646 = vld [vmem:[#allocation7 + $0x60] sm:$0xff]
    %v647 = vld [vmem:[#allocation7 + $0x68] sm:$0xff]
    %v648 = vld [vmem:[#allocation7 + $0x70] sm:$0xff]
    %v649 = vld [vmem:[#allocation7 + $0x78] sm:$0xff]
    %v650 = vld [vmem:[#allocation7 + $0x80] sm:$0xff]
    %v651 = vld [vmem:[#allocation7 + $0x88] sm:$0xff]
    %v652 = vld [vmem:[#allocation7 + $0x90] sm:$0xff]
    %v653 = vld [vmem:[#allocation7 + $0x98] sm:$0xff]
    %v654 = vld [vmem:[#allocation7 + $0xa0] sm:$0xff]
    %v655 = vld [vmem:[#allocation7 + $0xa8] sm:$0xff]
    %v656 = vld [vmem:[#allocation7 + $0xb0] sm:$0xff]
    %v657 = vld [vmem:[#allocation7 + $0xb8] sm:$0xff]
    %v658 = vld [vmem:[#allocation7 + $0xc0] sm:$0xff]
    %v659 = vld [vmem:[#allocation7 + $0xc8] sm:$0xff]
    %v660 = vld [vmem:[#allocation7 + $0xd0] sm:$0xff]
    %v661 = vld [vmem:[#allocation7 + $0xd8] sm:$0xff]
    %v662 = vld [vmem:[#allocation7 + $0xe0] sm:$0xff]
    %v663 = vld [vmem:[#allocation7 + $0xe8] sm:$0xff]
    %v664 = vld [vmem:[#allocation7 + $0xf0] sm:$0xff]
    %v665 = vld [vmem:[#allocation7 + $0xf8] sm:$0xff]
    %v666 = vld [vmem:[#allocation7 + $0x100] sm:$0xff]
    %v667 = vld [vmem:[#allocation7 + $0x108] sm:$0xff]
    %v668 = vld [vmem:[#allocation7 + $0x110] sm:$0xff]
    %v669 = vld [vmem:[#allocation7 + $0x118] sm:$0xff]
    %v670 = vld [vmem:[#allocation7 + $0x120] sm:$0xff]
    %v671 = vld [vmem:[#allocation7 + $0x128] sm:$0xff]
    %v672 = vld [vmem:[#allocation7 + $0x130] sm:$0xff]
    %v673 = vld [vmem:[#allocation7 + $0x138] sm:$0xff]
    %v674 = vld [vmem:[#allocation7 + $0x140] sm:$0xff]
    %v675 = vld [vmem:[#allocation7 + $0x148] sm:$0xff]
    %v676 = vld [vmem:[#allocation7 + $0x150] sm:$0xff]
    %v677 = vld [vmem:[#allocation7 + $0x158] sm:$0xff]
    %v678 = vld [vmem:[#allocation7 + $0x160] sm:$0xff]
    %v679 = vld [vmem:[#allocation7 + $0x168] sm:$0xff]
    %v680 = vld [vmem:[#allocation7 + $0x170] sm:$0xff]
    %v681 = vld [vmem:[#allocation7 + $0x178] sm:$0xff]
    %v682 = vld [vmem:[#allocation7 + $0x180] sm:$0xff]
    %v683 = vld [vmem:[#allocation7 + $0x188] sm:$0xff]
    %v684 = vld [vmem:[#allocation7 + $0x190] sm:$0xff]
    %v685 = vld [vmem:[#allocation7 + $0x198] sm:$0xff]
    %v686 = vld [vmem:[#allocation7 + $0x1a0] sm:$0xff]
    %v687 = vld [vmem:[#allocation7 + $0x1a8] sm:$0xff]
    %v688 = vld [vmem:[#allocation7 + $0x1b0] sm:$0xff]
    %v689 = vld [vmem:[#allocation7 + $0x1b8] sm:$0xff]
    %v690 = vld [vmem:[#allocation7 + $0x1c0] sm:$0xff]
    %v691 = vld [vmem:[#allocation7 + $0x1c8] sm:$0xff]
    %v692 = vld [vmem:[#allocation7 + $0x1d0] sm:$0xff]
    %v693 = vld [vmem:[#allocation7 + $0x1d8] sm:$0xff]
    %v694 = vld [vmem:[#allocation7 + $0x1e0] sm:$0xff]
    %v695 = vld [vmem:[#allocation7 + $0x1e8] sm:$0xff]
    %v696 = vld [vmem:[#allocation7 + $0x1f0] sm:$0xff]
    %v697 = vld [vmem:[#allocation7 + $0x1f8] sm:$0xff]
    %v698 = vld [vmem:[%s8] sm:$0x3]
    %v700 = vlaneseq
    %v701 = vshrl.u32 %v700, 7
    %v702 = vsub.s32 0, %v701
    %v703 = vrot.slane %v698, %v702
    %v704 = vlaneseq
    %v705 = vshrl.u32 %v704, 7
    %v706 = vsub.s32 1, %v705
    %v707 = vrot.slane %v698, %v706
    %v774 = vunpack.c.l.b16 %v634
    %v775 = vunpack.c.h.b16 %v634
    %v776 = vunpack.c.l.b16 %v635
    %v777 = vunpack.c.h.b16 %v635
    %v778 = vunpack.c.l.b16 %v636
    %v779 = vunpack.c.h.b16 %v636
    %v780 = vunpack.c.l.b16 %v637
    %v781 = vunpack.c.h.b16 %v637
    %v782 = vunpack.c.l.b16 %v638
    %v783 = vunpack.c.h.b16 %v638
    %v784 = vunpack.c.l.b16 %v639
    %v785 = vunpack.c.h.b16 %v639
    %v786 = vunpack.c.l.b16 %v640
    %v787 = vunpack.c.h.b16 %v640
    %v788 = vunpack.c.l.b16 %v641
    %v789 = vunpack.c.h.b16 %v641
    %v790 = vunpack.c.l.b16 %v642
    %v791 = vunpack.c.h.b16 %v642
    %v792 = vunpack.c.l.b16 %v643
    %v793 = vunpack.c.h.b16 %v643
    %v794 = vunpack.c.l.b16 %v644
    %v795 = vunpack.c.h.b16 %v644
    %v796 = vunpack.c.l.b16 %v645
    %v797 = vunpack.c.h.b16 %v645
    %v798 = vunpack.c.l.b16 %v646
    %v799 = vunpack.c.h.b16 %v646
    %v800 = vunpack.c.l.b16 %v647
    %v801 = vunpack.c.h.b16 %v647
    %v802 = vunpack.c.l.b16 %v648
    %v803 = vunpack.c.h.b16 %v648
    %v804 = vunpack.c.l.b16 %v649
    %v805 = vunpack.c.h.b16 %v649
    %v806 = vunpack.c.l.b16 %v650
    %v807 = vunpack.c.h.b16 %v650
    %v808 = vunpack.c.l.b16 %v651
    %v809 = vunpack.c.h.b16 %v651
    %v810 = vunpack.c.l.b16 %v652
    %v811 = vunpack.c.h.b16 %v652
    %v812 = vunpack.c.l.b16 %v653
    %v813 = vunpack.c.h.b16 %v653
    %v814 = vunpack.c.l.b16 %v654
    %v815 = vunpack.c.h.b16 %v654
    %v816 = vunpack.c.l.b16 %v655
    %v817 = vunpack.c.h.b16 %v655
    %v818 = vunpack.c.l.b16 %v656
    %v819 = vunpack.c.h.b16 %v656
    %v820 = vunpack.c.l.b16 %v657
    %v821 = vunpack.c.h.b16 %v657
    %v822 = vunpack.c.l.b16 %v658
    %v823 = vunpack.c.h.b16 %v658
    %v824 = vunpack.c.l.b16 %v659
    %v825 = vunpack.c.h.b16 %v659
    %v826 = vunpack.c.l.b16 %v660
    %v827 = vunpack.c.h.b16 %v660
    %v828 = vunpack.c.l.b16 %v661
    %v829 = vunpack.c.h.b16 %v661
    %v830 = vunpack.c.l.b16 %v662
    %v831 = vunpack.c.h.b16 %v662
    %v832 = vunpack.c.l.b16 %v663
    %v833 = vunpack.c.h.b16 %v663
    %v834 = vunpack.c.l.b16 %v664
    %v835 = vunpack.c.h.b16 %v664
    %v836 = vunpack.c.l.b16 %v665
    %v837 = vunpack.c.h.b16 %v665
    %v838 = vunpack.c.l.b16 %v666
    %v839 = vunpack.c.h.b16 %v666
    %v840 = vunpack.c.l.b16 %v667
    %v841 = vunpack.c.h.b16 %v667
    %v842 = vunpack.c.l.b16 %v668
    %v843 = vunpack.c.h.b16 %v668
    %v844 = vunpack.c.l.b16 %v669
    %v845 = vunpack.c.h.b16 %v669
    %v846 = vunpack.c.l.b16 %v670
    %v847 = vunpack.c.h.b16 %v670
    %v848 = vunpack.c.l.b16 %v671
    %v849 = vunpack.c.h.b16 %v671
    %v850 = vunpack.c.l.b16 %v672
    %v851 = vunpack.c.h.b16 %v672
    %v852 = vunpack.c.l.b16 %v673
    %v853 = vunpack.c.h.b16 %v673
    %v854 = vunpack.c.l.b16 %v674
    %v855 = vunpack.c.h.b16 %v674
    %v856 = vunpack.c.l.b16 %v675
    %v857 = vunpack.c.h.b16 %v675
    %v858 = vunpack.c.l.b16 %v676
    %v859 = vunpack.c.h.b16 %v676
    %v860 = vunpack.c.l.b16 %v677
    %v861 = vunpack.c.h.b16 %v677
    %v862 = vunpack.c.l.b16 %v678
    %v863 = vunpack.c.h.b16 %v678
    %v864 = vunpack.c.l.b16 %v679
    %v865 = vunpack.c.h.b16 %v679
    %v866 = vunpack.c.l.b16 %v680
    %v867 = vunpack.c.h.b16 %v680
    %v868 = vunpack.c.l.b16 %v681
    %v869 = vunpack.c.h.b16 %v681
    %v870 = vunpack.c.l.b16 %v682
    %v871 = vunpack.c.h.b16 %v682
    %v872 = vunpack.c.l.b16 %v683
    %v873 = vunpack.c.h.b16 %v683
    %v874 = vunpack.c.l.b16 %v684
    %v875 = vunpack.c.h.b16 %v684
    %v876 = vunpack.c.l.b16 %v685
    %v877 = vunpack.c.h.b16 %v685
    %v878 = vunpack.c.l.b16 %v686
    %v879 = vunpack.c.h.b16 %v686
    %v880 = vunpack.c.l.b16 %v687
    %v881 = vunpack.c.h.b16 %v687
    %v882 = vunpack.c.l.b16 %v688
    %v883 = vunpack.c.h.b16 %v688
    %v884 = vunpack.c.l.b16 %v689
    %v885 = vunpack.c.h.b16 %v689
    %v886 = vunpack.c.l.b16 %v690
    %v887 = vunpack.c.h.b16 %v690
    %v888 = vunpack.c.l.b16 %v691
    %v889 = vunpack.c.h.b16 %v691
    %v890 = vunpack.c.l.b16 %v692
    %v891 = vunpack.c.h.b16 %v692
    %v892 = vunpack.c.l.b16 %v693
    %v893 = vunpack.c.h.b16 %v693
    %v894 = vunpack.c.l.b16 %v694
    %v895 = vunpack.c.h.b16 %v694
    %v896 = vunpack.c.l.b16 %v695
    %v897 = vunpack.c.h.b16 %v695
    %v898 = vunpack.c.l.b16 %v696
    %v899 = vunpack.c.h.b16 %v696
    %v900 = vunpack.c.l.b16 %v697
    %v901 = vunpack.c.h.b16 %v697
    %v902 = vpack.c.b16 %v776, %v774
    %v903 = vpack.c.b16 %v777, %v775
    %v904 = vpack.c.b16 %v780, %v778
    %v905 = vpack.c.b16 %v781, %v779
    %v906 = vpack.c.b16 %v784, %v782
    %v907 = vpack.c.b16 %v785, %v783
    %v908 = vpack.c.b16 %v788, %v786
    %v909 = vpack.c.b16 %v789, %v787
    %v910 = vpack.c.b16 %v792, %v790
    %v911 = vpack.c.b16 %v793, %v791
    %v912 = vpack.c.b16 %v796, %v794
    %v913 = vpack.c.b16 %v797, %v795
    %v914 = vpack.c.b16 %v800, %v798
    %v915 = vpack.c.b16 %v801, %v799
    %v916 = vpack.c.b16 %v804, %v802
    %v917 = vpack.c.b16 %v805, %v803
    %v918 = vpack.c.b16 %v808, %v806
    %v919 = vpack.c.b16 %v809, %v807
    %v920 = vpack.c.b16 %v812, %v810
    %v921 = vpack.c.b16 %v813, %v811
    %v922 = vpack.c.b16 %v816, %v814
    %v923 = vpack.c.b16 %v817, %v815
    %v924 = vpack.c.b16 %v820, %v818
    %v925 = vpack.c.b16 %v821, %v819
    %v926 = vpack.c.b16 %v824, %v822
    %v927 = vpack.c.b16 %v825, %v823
    %v928 = vpack.c.b16 %v828, %v826
    %v929 = vpack.c.b16 %v829, %v827
    %v930 = vpack.c.b16 %v832, %v830
    %v931 = vpack.c.b16 %v833, %v831
    %v932 = vpack.c.b16 %v836, %v834
    %v933 = vpack.c.b16 %v837, %v835
    %v934 = vpack.c.b16 %v840, %v838
    %v935 = vpack.c.b16 %v841, %v839
    %v936 = vpack.c.b16 %v844, %v842
    %v937 = vpack.c.b16 %v845, %v843
    %v938 = vpack.c.b16 %v848, %v846
    %v939 = vpack.c.b16 %v849, %v847
    %v940 = vpack.c.b16 %v852, %v850
    %v941 = vpack.c.b16 %v853, %v851
    %v942 = vpack.c.b16 %v856, %v854
    %v943 = vpack.c.b16 %v857, %v855
    %v944 = vpack.c.b16 %v860, %v858
    %v945 = vpack.c.b16 %v861, %v859
    %v946 = vpack.c.b16 %v864, %v862
    %v947 = vpack.c.b16 %v865, %v863
    %v948 = vpack.c.b16 %v868, %v866
    %v949 = vpack.c.b16 %v869, %v867
    %v950 = vpack.c.b16 %v872, %v870
    %v951 = vpack.c.b16 %v873, %v871
    %v952 = vpack.c.b16 %v876, %v874
    %v953 = vpack.c.b16 %v877, %v875
    %v954 = vpack.c.b16 %v880, %v878
    %v955 = vpack.c.b16 %v881, %v879
    %v956 = vpack.c.b16 %v884, %v882
    %v957 = vpack.c.b16 %v885, %v883
    %v958 = vpack.c.b16 %v888, %v886
    %v959 = vpack.c.b16 %v889, %v887
    %v960 = vpack.c.b16 %v892, %v890
    %v961 = vpack.c.b16 %v893, %v891
    %v962 = vpack.c.b16 %v896, %v894
    %v963 = vpack.c.b16 %v897, %v895
    %v964 = vpack.c.b16 %v900, %v898
    %v965 = vpack.c.b16 %v901, %v899
    %1030 = vmatprep.subr.bf16.mxu0 %v903
    %1031 = vmatpush1.bf16.msra.mxu0 %v902
    %1032 = vmatprep.subr.bf16.mxu0 %v905
    %1033 = vmatpush1.bf16.msra.mxu0 %v904
    %1034 = vmatprep.subr.bf16.mxu0 %v907
    %1035 = vmatpush1.bf16.msra.mxu0 %v906
    %1036 = vmatprep.subr.bf16.mxu0 %v909
    %1037 = vmatpush1.bf16.msra.mxu0 %v908
    %1038 = vmatprep.subr.bf16.mxu0 %v911
    %1039 = vmatpush1.bf16.msra.mxu0 %v910
    %1040 = vmatprep.subr.bf16.mxu0 %v913
    %1041 = vmatpush1.bf16.msra.mxu0 %v912
    %1042 = vmatprep.subr.bf16.mxu0 %v915
    %1043 = vmatpush1.bf16.msra.mxu0 %v914
    %1044 = vmatprep.subr.bf16.mxu0 %v917
    %1045 = vmatpush1.bf16.msra.mxu0 %v916
    %1046 = vmatprep.subr.bf16.mxu0 %v919
    %1047 = vmatpush1.bf16.msra.mxu0 %v918
    %1048 = vmatprep.subr.bf16.mxu0 %v921
    %1049 = vmatpush1.bf16.msra.mxu0 %v920
    %1050 = vmatprep.subr.bf16.mxu0 %v923
    %1051 = vmatpush1.bf16.msra.mxu0 %v922
    %1052 = vmatprep.subr.bf16.mxu0 %v925
    %1053 = vmatpush1.bf16.msra.mxu0 %v924
    %1054 = vmatprep.subr.bf16.mxu0 %v927
    %1055 = vmatpush1.bf16.msra.mxu0 %v926
    %1056 = vmatprep.subr.bf16.mxu0 %v929
    %1057 = vmatpush1.bf16.msra.mxu0 %v928
    %1058 = vmatprep.subr.bf16.mxu0 %v931
    %1059 = vmatpush1.bf16.msra.mxu0 %v930
    %1060 = vmatprep.subr.bf16.mxu0 %v933
    %1061 = vmatpush1.bf16.msra.mxu0 %v932
    %1062 = vmatprep.mubr.bf16.mxu0 %v631
    %1063 = vmatmul.mubr.bf16.gmra.mrb[0].mxu0 %v630
    %v1064 = vpop.f32.mrb[0].mxu0
    %v1065 = vadd.f32 %v703, %v1064
    %v1066 = vpop.f32.mrb[0].mxu0
    %v1067 = vadd.f32 %v707, %v1066
    %v1068 = vpop.f32.mrb[0].mxu0
    %v1069 = vadd.f32 %v703, %v1068
    %v1070 = vpop.f32.mrb[0].mxu0
    %v1071 = vadd.f32 %v707, %v1070
    %1072 = vdwg.mxu0
    %1073 = vmatprep.subr.bf16.mxu0 %v935
    %1074 = vmatpush1.bf16.msra.mxu0 %v934
    %1075 = vmatprep.subr.bf16.mxu0 %v937
    %1076 = vmatpush1.bf16.msra.mxu0 %v936
    %1077 = vmatprep.subr.bf16.mxu0 %v939
    %1078 = vmatpush1.bf16.msra.mxu0 %v938
    %1079 = vmatprep.subr.bf16.mxu0 %v941
    %1080 = vmatpush1.bf16.msra.mxu0 %v940
    %1081 = vmatprep.subr.bf16.mxu0 %v943
    %1082 = vmatpush1.bf16.msra.mxu0 %v942
    %1083 = vmatprep.subr.bf16.mxu0 %v945
    %1084 = vmatpush1.bf16.msra.mxu0 %v944
    %1085 = vmatprep.subr.bf16.mxu0 %v947
    %1086 = vmatpush1.bf16.msra.mxu0 %v946
    %1087 = vmatprep.subr.bf16.mxu0 %v949
    %1088 = vmatpush1.bf16.msra.mxu0 %v948
    %1089 = vmatprep.subr.bf16.mxu0 %v951
    %1090 = vmatpush1.bf16.msra.mxu0 %v950
    %1091 = vmatprep.subr.bf16.mxu0 %v953
    %1092 = vmatpush1.bf16.msra.mxu0 %v952
    %1093 = vmatprep.subr.bf16.mxu0 %v955
    %1094 = vmatpush1.bf16.msra.mxu0 %v954
    %1095 = vmatprep.subr.bf16.mxu0 %v957
    %1096 = vmatpush1.bf16.msra.mxu0 %v956
    %1097 = vmatprep.subr.bf16.mxu0 %v959
    %1098 = vmatpush1.bf16.msra.mxu0 %v958
    %1099 = vmatprep.subr.bf16.mxu0 %v961
    %1100 = vmatpush1.bf16.msra.mxu0 %v960
    %1101 = vmatprep.subr.bf16.mxu0 %v963
    %1102 = vmatpush1.bf16.msra.mxu0 %v962
    %1103 = vmatprep.subr.bf16.mxu0 %v965
    %1104 = vmatpush1.bf16.msra.mxu0 %v964
    %1105 = vmatprep.mubr.bf16.mxu0 %v633
    %1106 = vmatmul.mubr.bf16.gmra.mrb[0].mxu0 %v632
    %v1107 = vpop.f32.mrb[0].mxu0
    %v1108 = vadd.f32 %v1065, %v1107
    %v1109 = vpop.f32.mrb[0].mxu0
    %v1110 = vadd.f32 %v1067, %v1109
    %v1111 = vpop.f32.mrb[0].mxu0
    %v1112 = vadd.f32 %v1069, %v1111
    %v1113 = vpop.f32.mrb[0].mxu0
    %v1114 = vadd.f32 %v1071, %v1113
    %1115 = vdwg.mxu0
    %v1116 = vmax.f32 %v1108, 0.0
    %v1117 = vmax.f32 %v1110, 0.0
    %v1118 = vmax.f32 %v1112, 0.0
    %v1119 = vmax.f32 %v1114, 0.0
    %v1120 = vpack.c.bf16 %v1118, %v1116
    %v1121 = vpack.c.bf16 %v1119, %v1117
    %v1122 = vld [vmem:[%s9] sm:$0xf]
    %v1123 = vld [vmem:[%s9 + $0x4] sm:$0xf]
    %v1124 = vld [vmem:[%s9 + $0x8] sm:$0xf]
    %v1125 = vld [vmem:[%s9 + $0xc] sm:$0xf]
    %v1126 = vld [vmem:[%s9 + $0x10] sm:$0xf]
    %v1127 = vld [vmem:[%s9 + $0x14] sm:$0xf]
    %v1128 = vld [vmem:[%s9 + $0x18] sm:$0xf]
    %v1129 = vld [vmem:[%s9 + $0x1c] sm:$0xf]
    %v1130 = vld [vmem:[%s9 + $0x20] sm:$0xf]
    %v1131 = vld [vmem:[%s9 + $0x24] sm:$0xf]
    %v1132 = vld [vmem:[%s9 + $0x28] sm:$0xf]
    %v1133 = vld [vmem:[%s9 + $0x2c] sm:$0xf]
    %v1134 = vld [vmem:[%s9 + $0x30] sm:$0xf]
    %v1135 = vld [vmem:[%s9 + $0x34] sm:$0xf]
    %v1136 = vld [vmem:[%s9 + $0x38] sm:$0xf]
    %v1137 = vld [vmem:[%s9 + $0x3c] sm:$0xf]
    %v1138 = vld [vmem:[%s9 + $0x40] sm:$0xf]
    %v1139 = vld [vmem:[%s9 + $0x44] sm:$0xf]
    %v1140 = vld [vmem:[%s9 + $0x48] sm:$0xf]
    %v1141 = vld [vmem:[%s9 + $0x4c] sm:$0xf]
    %v1142 = vld [vmem:[%s9 + $0x50] sm:$0xf]
    %v1143 = vld [vmem:[%s9 + $0x54] sm:$0xf]
    %v1144 = vld [vmem:[%s9 + $0x58] sm:$0xf]
    %v1145 = vld [vmem:[%s9 + $0x5c] sm:$0xf]
    %v1146 = vld [vmem:[%s9 + $0x60] sm:$0xf]
    %v1147 = vld [vmem:[%s9 + $0x64] sm:$0xf]
    %v1148 = vld [vmem:[%s9 + $0x68] sm:$0xf]
    %v1149 = vld [vmem:[%s9 + $0x6c] sm:$0xf]
    %v1150 = vld [vmem:[%s9 + $0x70] sm:$0xf]
    %v1151 = vld [vmem:[%s9 + $0x74] sm:$0xf]
    %v1152 = vld [vmem:[%s9 + $0x78] sm:$0xf]
    %v1153 = vld [vmem:[%s9 + $0x7c] sm:$0xf]
    %v1154 = vld [vmem:[%s10] sm:$0x1]
    %v1156 = vlaneseq
    %v1157 = vshrl.u32 %v1156, 7
    %v1158 = vsub.s32 0, %v1157
    %v1159 = vrot.slane %v1154, %v1158
    %v1193 = vunpack.c.l.b16 %v1122
    %v1194 = vunpack.c.l.b16 %v1123
    %v1195 = vunpack.c.l.b16 %v1124
    %v1196 = vunpack.c.l.b16 %v1125
    %v1197 = vunpack.c.l.b16 %v1126
    %v1198 = vunpack.c.l.b16 %v1127
    %v1199 = vunpack.c.l.b16 %v1128
    %v1200 = vunpack.c.l.b16 %v1129
    %v1201 = vunpack.c.l.b16 %v1130
    %v1202 = vunpack.c.l.b16 %v1131
    %v1203 = vunpack.c.l.b16 %v1132
    %v1204 = vunpack.c.l.b16 %v1133
    %v1205 = vunpack.c.l.b16 %v1134
    %v1206 = vunpack.c.l.b16 %v1135
    %v1207 = vunpack.c.l.b16 %v1136
    %v1208 = vunpack.c.l.b16 %v1137
    %v1209 = vunpack.c.l.b16 %v1138
    %v1210 = vunpack.c.l.b16 %v1139
    %v1211 = vunpack.c.l.b16 %v1140
    %v1212 = vunpack.c.l.b16 %v1141
    %v1213 = vunpack.c.l.b16 %v1142
    %v1214 = vunpack.c.l.b16 %v1143
    %v1215 = vunpack.c.l.b16 %v1144
    %v1216 = vunpack.c.l.b16 %v1145
    %v1217 = vunpack.c.l.b16 %v1146
    %v1218 = vunpack.c.l.b16 %v1147
    %v1219 = vunpack.c.l.b16 %v1148
    %v1220 = vunpack.c.l.b16 %v1149
    %v1221 = vunpack.c.l.b16 %v1150
    %v1222 = vunpack.c.l.b16 %v1151
    %v1223 = vunpack.c.l.b16 %v1152
    %v1224 = vunpack.c.l.b16 %v1153
    %v1225 = vpack.c.b16 %v1194, %v1193
    %v1226 = vpack.c.b16 %v1196, %v1195
    %v1227 = vpack.c.b16 %v1198, %v1197
    %v1228 = vpack.c.b16 %v1200, %v1199
    %v1229 = vpack.c.b16 %v1202, %v1201
    %v1230 = vpack.c.b16 %v1204, %v1203
    %v1231 = vpack.c.b16 %v1206, %v1205
    %v1232 = vpack.c.b16 %v1208, %v1207
    %v1233 = vpack.c.b16 %v1210, %v1209
    %v1234 = vpack.c.b16 %v1212, %v1211
    %v1235 = vpack.c.b16 %v1214, %v1213
    %v1236 = vpack.c.b16 %v1216, %v1215
    %v1237 = vpack.c.b16 %v1218, %v1217
    %v1238 = vpack.c.b16 %v1220, %v1219
    %v1239 = vpack.c.b16 %v1222, %v1221
    %v1240 = vpack.c.b16 %v1224, %v1223
    %1257 = vmatprep.subr.bf16.mxu0 0
    %1258 = vmatpush1.bf16.msra.mxu0 %v1225
    %1259 = vmatprep.subr.bf16.mxu0 0
    %1260 = vmatpush1.bf16.msra.mxu0 %v1226
    %1261 = vmatprep.subr.bf16.mxu0 0
    %1262 = vmatpush1.bf16.msra.mxu0 %v1227
    %1263 = vmatprep.subr.bf16.mxu0 0
    %1264 = vmatpush1.bf16.msra.mxu0 %v1228
    %1265 = vmatprep.subr.bf16.mxu0 0
    %1266 = vmatpush1.bf16.msra.mxu0 %v1229
    %1267 = vmatprep.subr.bf16.mxu0 0
    %1268 = vmatpush1.bf16.msra.mxu0 %v1230
    %1269 = vmatprep.subr.bf16.mxu0 0
    %1270 = vmatpush1.bf16.msra.mxu0 %v1231
    %1271 = vmatprep.subr.bf16.mxu0 0
    %1272 = vmatpush1.bf16.msra.mxu0 %v1232
    %1273 = vmatprep.subr.bf16.mxu0 0
    %1274 = vmatpush1.bf16.msra.mxu0 %v1233
    %1275 = vmatprep.subr.bf16.mxu0 0
    %1276 = vmatpush1.bf16.msra.mxu0 %v1234
    %1277 = vmatprep.subr.bf16.mxu0 0
    %1278 = vmatpush1.bf16.msra.mxu0 %v1235
    %1279 = vmatprep.subr.bf16.mxu0 0
    %1280 = vmatpush1.bf16.msra.mxu0 %v1236
    %1281 = vmatprep.subr.bf16.mxu0 0
    %1282 = vmatpush1.bf16.msra.mxu0 %v1237
    %1283 = vmatprep.subr.bf16.mxu0 0
    %1284 = vmatpush1.bf16.msra.mxu0 %v1238
    %1285 = vmatprep.subr.bf16.mxu0 0
    %1286 = vmatpush1.bf16.msra.mxu0 %v1239
    %1287 = vmatprep.subr.bf16.mxu0 0
    %1288 = vmatpush1.bf16.msra.mxu0 %v1240
    %1289 = vmatprep.mubr.bf16.mxu0 %v1121
    %1290 = vmatmul.mubr.bf16.gmra.mrb[0].mxu0 %v1120
    %v1291 = vpop.f32.mrb[0].mxu0
    %v1292 = vadd.f32 %v1159, %v1291
    %v1293 = vpop.f32.mrb[0].mxu0
    %v1294 = vpop.f32.mrb[0].mxu0
    %v1295 = vadd.f32 %v1159, %v1294
    %v1296 = vpop.f32.mrb[0].mxu0
    %1297 = vdwg.mxu0
    %v1298 = vmax.f32 %v1292, 0.0
    %v1299 = vmax.f32 %v1295, 0.0
    %v1300 = vpack.c.bf16 %v629, %v628
    %v1301 = vld [vmem:[%s11] sm:$0xf]
    %v1302 = vld [vmem:[%s11 + $0x4] sm:$0xf]
    %v1303 = vld [vmem:[%s11 + $0x8] sm:$0xf]
    %v1304 = vld [vmem:[%s11 + $0xc] sm:$0xf]
    %v1305 = vld [vmem:[%s11 + $0x10] sm:$0xf]
    %v1306 = vld [vmem:[%s11 + $0x14] sm:$0xf]
    %v1307 = vld [vmem:[%s11 + $0x18] sm:$0xf]
    %v1308 = vld [vmem:[%s11 + $0x1c] sm:$0xf]
    %v1309 = vpack.c.bf16 %v1299, %v1298
    %v1310 = vld [vmem:[%s12] sm:$0xf]
    %v1311 = vld [vmem:[%s12 + $0x4] sm:$0xf]
    %v1312 = vld [vmem:[%s12 + $0x8] sm:$0xf]
    %v1313 = vld [vmem:[%s12 + $0xc] sm:$0xf]
    %v1314 = vld [vmem:[%s12 + $0x10] sm:$0xf]
    %v1315 = vld [vmem:[%s12 + $0x14] sm:$0xf]
    %v1316 = vld [vmem:[%s12 + $0x18] sm:$0xf]
    %v1317 = vld [vmem:[%s12 + $0x1c] sm:$0xf]
    %v1326 = vunpack.c.l.b16 %v1310
    %v1327 = vunpack.c.l.b16 %v1311
    %v1328 = vunpack.c.l.b16 %v1312
    %v1329 = vunpack.c.l.b16 %v1313
    %v1330 = vunpack.c.l.b16 %v1314
    %v1331 = vunpack.c.l.b16 %v1315
    %v1332 = vunpack.c.l.b16 %v1316
    %v1333 = vunpack.c.l.b16 %v1317
    %v1334 = vpack.c.b16 %v1327, %v1326
    %v1335 = vpack.c.b16 %v1329, %v1328
    %v1336 = vpack.c.b16 %v1331, %v1330
    %v1337 = vpack.c.b16 %v1333, %v1332
    %v1343 = vsel %vm495, %v1309, 0
    %1345 = vmatprep.subr.bf16.mxu0 0
    %1346 = vmatpush1.bf16.msra.mxu0 %v1334
    %1347 = vmatprep.subr.bf16.mxu0 0
    %1348 = vmatpush1.bf16.msra.mxu0 %v1335
    %1349 = vmatprep.subr.bf16.mxu0 0
    %1350 = vmatpush1.bf16.msra.mxu0 %v1336
    %1351 = vmatprep.subr.bf16.mxu0 0
    %1352 = vmatpush1.bf16.msra.mxu0 %v1337
    %1353 = vmatprep.subr.bf16.mxu0 0
    %1354 = vmatpush1.bf16.msra.mxu0 0
    %1355 = vmatprep.subr.bf16.mxu0 0
    %1356 = vmatpush1.bf16.msra.mxu0 0
    %1357 = vmatprep.subr.bf16.mxu0 0
    %1358 = vmatpush1.bf16.msra.mxu0 0
    %1359 = vmatprep.subr.bf16.mxu0 0
    %1360 = vmatpush1.bf16.msra.mxu0 0
    %1361 = vmatprep.subr.bf16.mxu0 0
    %1362 = vmatpush1.bf16.msra.mxu0 0
    %1363 = vmatprep.subr.bf16.mxu0 0
    %1364 = vmatpush1.bf16.msra.mxu0 0
    %1365 = vmatprep.subr.bf16.mxu0 0
    %1366 = vmatpush1.bf16.msra.mxu0 0
    %1367 = vmatprep.subr.bf16.mxu0 0
    %1368 = vmatpush1.bf16.msra.mxu0 0
    %1369 = vmatprep.subr.bf16.mxu0 0
    %1370 = vmatpush1.bf16.msra.mxu0 0
    %1371 = vmatprep.subr.bf16.mxu0 0
    %1372 = vmatpush1.bf16.msra.mxu0 0
    %1373 = vmatprep.subr.bf16.mxu0 0
    %1374 = vmatpush1.bf16.msra.mxu0 0
    %1375 = vmatprep.subr.bf16.mxu0 0
    %1376 = vmatpush1.bf16.msra.mxu0 0
    %1377 = vmatprep.mubr.bf16.mxu0 0
    %1378 = vmatmul.mubr.bf16.gmra.mrb[0].mxu0 %v1343
    %v1379 = vpop.f32.mrb[0].mxu0
    %v1380 = vadd.f32 0.0, %v1379
    %v1381 = vpop.f32.mrb[0].mxu0
    %v1382 = vpop.f32.mrb[0].mxu0
    %v1383 = vadd.f32 0.0, %v1382
    %v1384 = vpop.f32.mrb[0].mxu0
    %1385 = vdwg.mxu0
    %1387 = vrot.lane.b32.xlu0 %v1300, 64
    %v1388 = vpop.permute.xlu0 %1387
    %v1397 = vunpack.c.l.b16 %v1301
    %v1398 = vunpack.c.l.b16 %v1302
    %v1399 = vunpack.c.l.b16 %v1303
    %v1400 = vunpack.c.l.b16 %v1304
    %v1401 = vunpack.c.l.b16 %v1305
    %v1402 = vunpack.c.l.b16 %v1306
    %v1403 = vunpack.c.l.b16 %v1307
    %v1404 = vunpack.c.l.b16 %v1308
    %v1405 = vpack.c.b16 %v1398, %v1397
    %v1406 = vpack.c.b16 %v1400, %v1399
    %v1407 = vpack.c.b16 %v1402, %v1401
    %v1408 = vpack.c.b16 %v1404, %v1403
    %v1414 = vsel %vm495, %v1388, 0
    %1416 = vmatprep.subr.bf16.mxu0 0
    %1417 = vmatpush1.bf16.msra.mxu0 %v1405
    %1418 = vmatprep.subr.bf16.mxu0 0
    %1419 = vmatpush1.bf16.msra.mxu0 %v1406
    %1420 = vmatprep.subr.bf16.mxu0 0
    %1421 = vmatpush1.bf16.msra.mxu0 %v1407
    %1422 = vmatprep.subr.bf16.mxu0 0
    %1423 = vmatpush1.bf16.msra.mxu0 %v1408
    %1424 = vmatprep.subr.bf16.mxu0 0
    %1425 = vmatpush1.bf16.msra.mxu0 0
    %1426 = vmatprep.subr.bf16.mxu0 0
    %1427 = vmatpush1.bf16.msra.mxu0 0
    %1428 = vmatprep.subr.bf16.mxu0 0
    %1429 = vmatpush1.bf16.msra.mxu0 0
    %1430 = vmatprep.subr.bf16.mxu0 0
    %1431 = vmatpush1.bf16.msra.mxu0 0
    %1432 = vmatprep.subr.bf16.mxu0 0
    %1433 = vmatpush1.bf16.msra.mxu0 0
    %1434 = vmatprep.subr.bf16.mxu0 0
    %1435 = vmatpush1.bf16.msra.mxu0 0
    %1436 = vmatprep.subr.bf16.mxu0 0
    %1437 = vmatpush1.bf16.msra.mxu0 0
    %1438 = vmatprep.subr.bf16.mxu0 0
    %1439 = vmatpush1.bf16.msra.mxu0 0
    %1440 = vmatprep.subr.bf16.mxu0 0
    %1441 = vmatpush1.bf16.msra.mxu0 0
    %1442 = vmatprep.subr.bf16.mxu0 0
    %1443 = vmatpush1.bf16.msra.mxu0 0
    %1444 = vmatprep.subr.bf16.mxu0 0
    %1445 = vmatpush1.bf16.msra.mxu0 0
    %1446 = vmatprep.subr.bf16.mxu0 0
    %1447 = vmatpush1.bf16.msra.mxu0 0
    %1448 = vmatprep.mubr.bf16.mxu0 0
    %1449 = vmatmul.mubr.bf16.gmra.mrb[0].mxu0 %v1414
    %v1450 = vpop.f32.mrb[0].mxu0
    %v1451 = vadd.f32 %v1380, %v1450
    %v1452 = vpop.f32.mrb[0].mxu0
    %v1453 = vpop.f32.mrb[0].mxu0
    %v1454 = vadd.f32 %v1383, %v1453
    %v1455 = vpop.f32.mrb[0].mxu0
    %1456 = vdwg.mxu0
    %v1457 = vld [vmem:[%s13] sm:$0x1]
    %v1459 = vlaneseq
    %v1460 = vshrl.u32 %v1459, 7
    %v1461 = vsub.s32 0, %v1460
    %v1462 = vrot.slane %v1457, %v1461
    %v1464 = vadd.f32 %v1451, %v1462
    %v1465 = vadd.f32 %v1454, %v1462
    %1466 = vst [vmem:[#allocation8] sm:$0xff] %v1464
    %1467 = vst [vmem:[#allocation8 + $0x8] sm:$0xff] %v1465
    %1470 = vrot.lane.b32.xlu0 %v628, 64
    %v1471 = vpop.permute.xlu0 %1470
    %1472 = vrot.lane.b32.xlu0 %v629, 64
    %v1473 = vpop.permute.xlu0 %1472
    %1476 = vst.msk [vmem:[#allocation9] sm:$0xff] %vm495, %v1471
    %1477 = vst.msk [vmem:[#allocation9 + $0x8] sm:$0xff] %vm495, %v1473
    // Predicated region
    $region70: #{tpu_custom_call.1} parent=1 // pred_check
      _
    $region71: #{tpu_custom_call.1} parent=1 // pred_check_branch
      %1479 = sbr.rel (0) target = $region73
    $region72: #{tpu_custom_call.1} parent=1 // pred_region
      %s1481 = ssub.s32 256, 256
      %1482 = vsyncadd [#allocation4], %s1481
      %s1483 = sshll.u32 [#allocation8], 4
      %s1484 = int_to_ptr.vmem [resolvable:$true] %s1483
      %1489 = dma.vmem_to_hbm [thread:$0]  %s1484, 256, %s14, [#allocation4], 128, 128, 8
    $region73: #{tpu_custom_call.1} parent=1 // pred_fallthru
      _
    // Predicated region
    $region74: #{tpu_custom_call.1} parent=1 // pred_check
      _
    $region75: #{tpu_custom_call.1} parent=1 // pred_check_branch
      %1491 = sbr.rel (0) target = $region77
    $region76: #{tpu_custom_call.1} parent=1 // pred_region
      %s1493 = ssub.s32 256, 256
      %1494 = vsyncadd [#allocation10], %s1493
      %s1495 = sshll.u32 [#allocation9], 4
      %s1496 = int_to_ptr.vmem [resolvable:$true] %s1495
      %1501 = dma.vmem_to_hbm [thread:$0]  %s1496, 256, %s15, [#allocation10], 128, 128, 8
    $region77: #{tpu_custom_call.1} parent=1 // pred_fallthru
      _
    // Predicated region
    $region78: #{tpu_custom_call.1} parent=1 // pred_check
      _
    $region79: #{tpu_custom_call.1} parent=1 // pred_check_branch
      %1503 = sbr.rel (0) target = $region81
    $region80: #{tpu_custom_call.1} parent=1 // pred_region
      %1504 = dma.done [#allocation4], 256
    $region81: #{tpu_custom_call.1} parent=1 // pred_fallthru
      _
    // Predicated region
    $region82: #{tpu_custom_call.1} parent=1 // pred_check
      _
    $region83: #{tpu_custom_call.1} parent=1 // pred_check_branch
      %1506 = sbr.rel (0) target = $region85
    $region84: #{tpu_custom_call.1} parent=1 // pred_region
      %1507 = dma.done [#allocation10], 256
    $region85: #{tpu_custom_call.1} parent=1 // pred_fallthru
      _
    %1508 = vsyncpa [#allocation3], 1
    %1509 = vsyncpa [#allocation6], 1
    %1510 = vsyncpa [#allocation4], 1
    %1511 = vsyncpa [#allocation10], 1

</llo_original>
